<compile_context>
chip_gen: v7x
topology: tpu7x:2x2x1
jax: 0.10.0
libtpu: 0.0.40
codegen_flags: <defaults>
</compile_context>

<pallas_src>
import jax
import jax.numpy as jnp
import numpy as np
from jax.experimental import pallas as pl
from jax.experimental.pallas import tpu as pltpu


def _round_up(x, m):
    return (x + m - 1) // m * m


def rnn_kernel(tok_ref,               # SMEM (T*Bp,) int32 tokens (time-major)
               h0_ref,                # VMEM (Bp, Hp)  initial hidden state
               wih_ref,               # VMEM (V,  Hp)  W_ih^T (embedding rows)
               whh_ref,               # VMEM (Hp, Hp)  W_hh^T
               b_ref,                 # VMEM (1,  Hp)  b_ih + b_hh
               wout_ref,              # VMEM (Hp, Vp)  W_out^T (zero-padded)
               bout_ref,              # VMEM (1,  Vp)  b_out   (zero-padded)
               out_ref,               # VMEM (T*Bp, Vp) logits (lane-dense)
               hT_ref,                # VMEM (Bp, Hp)  final hidden state
               hall_ref):             # VMEM scratch (T*Bp, Hp)
    TBp, _ = hall_ref.shape
    Bp = h0_ref.shape[0]
    T = TBp // Bp

    # ---- Phase 1: input projection as an embedding gather (no one-hot matmul).
    # x_t is one-hot, so x_t @ W_ih^T is just the token'th row of W_ih^T.
    for i in range(TBp):                      # fully unrolled at trace time
        tok = tok_ref[i]                      # scalar read from SMEM
        hall_ref[pl.ds(i, 1), :] = wih_ref[pl.ds(tok, 1), :]

    # ---- Phase 2: sequential recurrence; h stays in vregs, xw rows are
    # overwritten in place with h_t so a single scratch serves both roles.
    # Offsets t*Bp are static multiples of 8 -> aligned, unmasked (Bp,Hp) tiles.
    h = h0_ref[...]
    whh = whh_ref[...]
    bias = b_ref[...]
    for t in range(T):
        xw = hall_ref[pl.ds(t * Bp, Bp), :]                     # (Bp, Hp)
        h = jnp.tanh(xw
                     + jnp.dot(h, whh, preferred_element_type=jnp.float32)
                     + bias)
        hall_ref[pl.ds(t * Bp, Bp), :] = h
    hT_ref[...] = h

    # ---- Phase 3: decoder hoisted out of the loop: one (T*Bp,Hp)@(Hp,Vp)
    # matmul and one large lane-dense store.
    out_ref[...] = (jnp.dot(hall_ref[...], wout_ref[...],
                            preferred_element_type=jnp.float32)
                    + bout_ref[...])


def rnn_model_forward(inputs, state, params):
    """inputs: (B, T) int32 tokens.  state: (1, B, H) f32.
    Returns (output (T*B, V) f32, state (1, B, H) f32)."""
    w_ih, w_hh, b_ih, b_hh, w_out, b_out = params
    H, V = w_ih.shape
    B, T = inputs.shape
    Bp = _round_up(B, 8)                    # sublane-aligned batch rows
    Hp = _round_up(H, 128)                  # lane-aligned hidden width
    Vp = _round_up(V, 128)                  # lane-dense logits width

    # Time-major flat tokens, batch padded (padded rows compute garbage that is
    # row-independent and sliced off below).  Row order t*Bp + b.
    tokens = jnp.zeros((T, Bp), jnp.int32).at[:, :B].set(inputs.T.astype(jnp.int32))
    tokens = tokens.reshape(-1)                                          # (T*Bp,)

    h0 = jnp.zeros((Bp, Hp), jnp.float32).at[:B, :H].set(state[0])
    wih_t = jnp.zeros((V, Hp), jnp.float32).at[:, :H].set(w_ih.T)        # (V, Hp)
    whh_t = jnp.zeros((Hp, Hp), jnp.float32).at[:H, :H].set(w_hh.T)      # (Hp, Hp)
    b_sum = jnp.zeros((1, Hp), jnp.float32).at[0, :H].set(b_ih + b_hh)   # (1, Hp)
    wout_pad = jnp.zeros((Hp, Vp), jnp.float32).at[:H, :V].set(w_out.T)  # (Hp, Vp)
    bout_pad = jnp.zeros((1, Vp), jnp.float32).at[0, :V].set(b_out)      # (1, Vp)

    out_pad, hT = pl.pallas_call(
        rnn_kernel,
        out_shape=(
            jax.ShapeDtypeStruct((T * Bp, Vp), jnp.float32),
            jax.ShapeDtypeStruct((Bp, Hp), jnp.float32),
        ),
        grid_spec=pltpu.PrefetchScalarGridSpec(
            num_scalar_prefetch=1,                 # tokens -> SMEM
            grid=(1,),                             # whole forward in one step
            in_specs=[
                pl.BlockSpec((Bp, Hp), lambda i, tok: (0, 0)),     # h0
                pl.BlockSpec((V, Hp), lambda i, tok: (0, 0)),      # W_ih^T
                pl.BlockSpec((Hp, Hp), lambda i, tok: (0, 0)),     # W_hh^T
                pl.BlockSpec((1, Hp), lambda i, tok: (0, 0)),      # b_ih + b_hh
                pl.BlockSpec((Hp, Vp), lambda i, tok: (0, 0)),     # W_out^T pad
                pl.BlockSpec((1, Vp), lambda i, tok: (0, 0)),      # b_out pad
            ],
            out_specs=[
                pl.BlockSpec((T * Bp, Vp), lambda i, tok: (0, 0)),  # logits
                pl.BlockSpec((Bp, Hp), lambda i, tok: (0, 0)),      # final state
            ],
            scratch_shapes=[pltpu.VMEM((T * Bp, Hp), jnp.float32)],
        ),
        compiler_params=pltpu.CompilerParams(
            dimension_semantics=("arbitrary",)),
    )(tokens, h0, wih_t, whh_t, b_sum, wout_pad, bout_pad)

    # Drop batch-row and lane padding.
    output = out_pad.reshape(T, Bp, Vp)[:, :B, :V].reshape(T * B, V)
    return output, hT[:B, :H][None]              # state: (1, B, H)


def reference_forward(inputs, state, params):
    """Pure-JAX reference (lax.scan) for correctness check."""
    w_ih, w_hh, b_ih, b_hh, w_out, b_out = params
    V = w_ih.shape[1]
    x = jax.nn.one_hot(inputs.T, V, dtype=jnp.float32)   # (T, B, V)
    h0 = state[0]

    def step(h, x_t):
        h_new = jnp.tanh(x_t @ w_ih.T + b_ih + h @ w_hh.T + b_hh)
        return h_new, h_new

    hT, Y = jax.lax.scan(step, h0, x)                     # Y: (T, B, H)
    out = Y.reshape(-1, Y.shape[-1]) @ w_out.T + b_out
    return out, hT[None]


if __name__ == "__main__":
    # Small, self-consistent shapes.
    vocab_size = 28
    num_hiddens = 32
    batch_size = 4
    num_steps = 8

    key = jax.random.PRNGKey(0)
    k_tok, k1, k2, k3, k4, k5, k6 = jax.random.split(key, 7)

    # Deterministic parameter init (uniform(-1/sqrt(H), 1/sqrt(H)), like nn.RNN).
    bound = 1.0 / np.sqrt(num_hiddens)
    w_ih = jax.random.uniform(k1, (num_hiddens, vocab_size), jnp.float32, -bound, bound)
    w_hh = jax.random.uniform(k2, (num_hiddens, num_hiddens), jnp.float32, -bound, bound)
    b_ih = jax.random.uniform(k3, (num_hiddens,), jnp.float32, -bound, bound)
    b_hh = jax.random.uniform(k4, (num_hiddens,), jnp.float32, -bound, bound)
    w_out = jax.random.uniform(k5, (vocab_size, num_hiddens), jnp.float32, -bound, bound)
    b_out = jax.random.uniform(k6, (vocab_size,), jnp.float32, -bound, bound)
    params = (w_ih, w_hh, b_ih, b_hh, w_out, b_out)

    inputs = jax.random.randint(k_tok, (batch_size, num_steps), 0, vocab_size,
                                dtype=jnp.int32)
    state0 = jnp.zeros((1, batch_size, num_hiddens), jnp.float32)  # begin_state

    output, state = rnn_model_forward(inputs, state0, params)
    jax.block_until_ready((output, state))

    ref_out, ref_state = reference_forward(inputs, state0, params)
    np.testing.assert_allclose(np.asarray(output), np.asarray(ref_out),
                               rtol=1e-5, atol=1e-5)
    np.testing.assert_allclose(np.asarray(state), np.asarray(ref_state),
                               rtol=1e-5, atol=1e-5)

    assert output.shape == (num_steps * batch_size, vocab_size)
    assert state.shape == (1, batch_size, num_hiddens)
    print("KERNEL_OK")
</pallas_src>

<mosaic_0001>
module attributes {stable_mosaic.version = 11 : i64} {
  func.func @rnn_kernel(%arg0: i32, %arg1: memref<64xi32, #tpu.memory_space<smem>>, %arg2: memref<8x128xf32, #tpu.memory_space<vmem>>, %arg3: memref<28x128xf32, #tpu.memory_space<vmem>>, %arg4: memref<128x128xf32, #tpu.memory_space<vmem>>, %arg5: memref<1x128xf32, #tpu.memory_space<vmem>>, %arg6: memref<128x128xf32, #tpu.memory_space<vmem>>, %arg7: memref<1x128xf32, #tpu.memory_space<vmem>>, %arg8: memref<64x128xf32, #tpu.memory_space<vmem>>, %arg9: memref<8x128xf32, #tpu.memory_space<vmem>>, %arg10: memref<64x128xf32, #tpu.memory_space<vmem>>) attributes {dimension_semantics = [#tpu.dimension_semantics<arbitrary>], iteration_bounds = array<i64: 1>, scalar_prefetch = 1 : i64, scratch_operands = 1 : i64, tpu.core_type = #tpu.core_type<tc>, window_params = [{pipeline_mode = #tpu.pipeline_mode<synchronous>, transform_indices = @transform_0, window_bounds = array<i64: 8, 128>}, {pipeline_mode = #tpu.pipeline_mode<synchronous>, transform_indices = @transform_1, window_bounds = array<i64: 28, 128>}, {pipeline_mode = #tpu.pipeline_mode<synchronous>, transform_indices = @transform_2, window_bounds = array<i64: 128, 128>}, {pipeline_mode = #tpu.pipeline_mode<synchronous>, transform_indices = @transform_3, window_bounds = array<i64: 1, 128>}, {pipeline_mode = #tpu.pipeline_mode<synchronous>, transform_indices = @transform_4, window_bounds = array<i64: 128, 128>}, {pipeline_mode = #tpu.pipeline_mode<synchronous>, transform_indices = @transform_5, window_bounds = array<i64: 1, 128>}, {pipeline_mode = #tpu.pipeline_mode<synchronous>, transform_indices = @transform_6, window_bounds = array<i64: 64, 128>}, {pipeline_mode = #tpu.pipeline_mode<synchronous>, transform_indices = @transform_7, window_bounds = array<i64: 8, 128>}]} {
    %c0 = arith.constant 0 : index
    %0 = memref.load %arg1[%c0] : memref<64xi32, #tpu.memory_space<smem>>
    %1 = arith.index_cast %0 : i32 to index
    %c0_0 = arith.constant 0 : index
    %2 = vector.load %arg3[%1, %c0_0] : memref<28x128xf32, #tpu.memory_space<vmem>>, vector<1x128xf32>
    %c0_1 = arith.constant 0 : index
    %c0_2 = arith.constant 0 : index
    %3 = vector.load %arg10[%c0_1, %c0_2] : memref<64x128xf32, #tpu.memory_space<vmem>>, vector<1x128xf32>
    tpu.vector_store %arg10[%c0_1, %c0_2], %2 {strides = array<i32>} : memref<64x128xf32, #tpu.memory_space<vmem>>, vector<1x128xf32>,
    %c1 = arith.constant 1 : index
    %4 = memref.load %arg1[%c1] : memref<64xi32, #tpu.memory_space<smem>>
    %5 = arith.index_cast %4 : i32 to index
    %c0_3 = arith.constant 0 : index
    %6 = vector.load %arg3[%5, %c0_3] : memref<28x128xf32, #tpu.memory_space<vmem>>, vector<1x128xf32>
    %c1_4 = arith.constant 1 : index
    %c0_5 = arith.constant 0 : index
    %7 = vector.load %arg10[%c1_4, %c0_5] : memref<64x128xf32, #tpu.memory_space<vmem>>, vector<1x128xf32>
    tpu.vector_store %arg10[%c1_4, %c0_5], %6 {strides = array<i32>} : memref<64x128xf32, #tpu.memory_space<vmem>>, vector<1x128xf32>,
    %c2 = arith.constant 2 : index
    %8 = memref.load %arg1[%c2] : memref<64xi32, #tpu.memory_space<smem>>
    %9 = arith.index_cast %8 : i32 to index
    %c0_6 = arith.constant 0 : index
    %10 = vector.load %arg3[%9, %c0_6] : memref<28x128xf32, #tpu.memory_space<vmem>>, vector<1x128xf32>
    %c2_7 = arith.constant 2 : index
    %c0_8 = arith.constant 0 : index
    %11 = vector.load %arg10[%c2_7, %c0_8] : memref<64x128xf32, #tpu.memory_space<vmem>>, vector<1x128xf32>
    tpu.vector_store %arg10[%c2_7, %c0_8], %10 {strides = array<i32>} : memref<64x128xf32, #tpu.memory_space<vmem>>, vector<1x128xf32>,
    %c3 = arith.constant 3 : index
    %12 = memref.load %arg1[%c3] : memref<64xi32, #tpu.memory_space<smem>>
    %13 = arith.index_cast %12 : i32 to index
    %c0_9 = arith.constant 0 : index
    %14 = vector.load %arg3[%13, %c0_9] : memref<28x128xf32, #tpu.memory_space<vmem>>, vector<1x128xf32>
    %c3_10 = arith.constant 3 : index
    %c0_11 = arith.constant 0 : index
    %15 = vector.load %arg10[%c3_10, %c0_11] : memref<64x128xf32, #tpu.memory_space<vmem>>, vector<1x128xf32>
    tpu.vector_store %arg10[%c3_10, %c0_11], %14 {strides = array<i32>} : memref<64x128xf32, #tpu.memory_space<vmem>>, vector<1x128xf32>,
    %c4 = arith.constant 4 : index
    %16 = memref.load %arg1[%c4] : memref<64xi32, #tpu.memory_space<smem>>
    %17 = arith.index_cast %16 : i32 to index
    %c0_12 = arith.constant 0 : index
    %18 = vector.load %arg3[%17, %c0_12] : memref<28x128xf32, #tpu.memory_space<vmem>>, vector<1x128xf32>
    %c4_13 = arith.constant 4 : index
    %c0_14 = arith.constant 0 : index
    %19 = vector.load %arg10[%c4_13, %c0_14] : memref<64x128xf32, #tpu.memory_space<vmem>>, vector<1x128xf32>
    tpu.vector_store %arg10[%c4_13, %c0_14], %18 {strides = array<i32>} : memref<64x128xf32, #tpu.memory_space<vmem>>, vector<1x128xf32>,
    %c5 = arith.constant 5 : index
    %20 = memref.load %arg1[%c5] : memref<64xi32, #tpu.memory_space<smem>>
    %21 = arith.index_cast %20 : i32 to index
    %c0_15 = arith.constant 0 : index
    %22 = vector.load %arg3[%21, %c0_15] : memref<28x128xf32, #tpu.memory_space<vmem>>, vector<1x128xf32>
    %c5_16 = arith.constant 5 : index
    %c0_17 = arith.constant 0 : index
    %23 = vector.load %arg10[%c5_16, %c0_17] : memref<64x128xf32, #tpu.memory_space<vmem>>, vector<1x128xf32>
    tpu.vector_store %arg10[%c5_16, %c0_17], %22 {strides = array<i32>} : memref<64x128xf32, #tpu.memory_space<vmem>>, vector<1x128xf32>,
    %c6 = arith.constant 6 : index
    %24 = memref.load %arg1[%c6] : memref<64xi32, #tpu.memory_space<smem>>
    %25 = arith.index_cast %24 : i32 to index
    %c0_18 = arith.constant 0 : index
    %26 = vector.load %arg3[%25, %c0_18] : memref<28x128xf32, #tpu.memory_space<vmem>>, vector<1x128xf32>
    %c6_19 = arith.constant 6 : index
    %c0_20 = arith.constant 0 : index
    %27 = vector.load %arg10[%c6_19, %c0_20] : memref<64x128xf32, #tpu.memory_space<vmem>>, vector<1x128xf32>
    tpu.vector_store %arg10[%c6_19, %c0_20], %26 {strides = array<i32>} : memref<64x128xf32, #tpu.memory_space<vmem>>, vector<1x128xf32>,
    %c7 = arith.constant 7 : index
    %28 = memref.load %arg1[%c7] : memref<64xi32, #tpu.memory_space<smem>>
    %29 = arith.index_cast %28 : i32 to index
    %c0_21 = arith.constant 0 : index
    %30 = vector.load %arg3[%29, %c0_21] : memref<28x128xf32, #tpu.memory_space<vmem>>, vector<1x128xf32>
    %c7_22 = arith.constant 7 : index
    %c0_23 = arith.constant 0 : index
    %31 = vector.load %arg10[%c7_22, %c0_23] : memref<64x128xf32, #tpu.memory_space<vmem>>, vector<1x128xf32>
    tpu.vector_store %arg10[%c7_22, %c0_23], %30 {strides = array<i32>} : memref<64x128xf32, #tpu.memory_space<vmem>>, vector<1x128xf32>,
    %c8 = arith.constant 8 : index
    %32 = memref.load %arg1[%c8] : memref<64xi32, #tpu.memory_space<smem>>
    %33 = arith.index_cast %32 : i32 to index
    %c0_24 = arith.constant 0 : index
    %34 = vector.load %arg3[%33, %c0_24] : memref<28x128xf32, #tpu.memory_space<vmem>>, vector<1x128xf32>
    %c8_25 = arith.constant 8 : index
    %c0_26 = arith.constant 0 : index
    %35 = vector.load %arg10[%c8_25, %c0_26] : memref<64x128xf32, #tpu.memory_space<vmem>>, vector<1x128xf32>
    tpu.vector_store %arg10[%c8_25, %c0_26], %34 {strides = array<i32>} : memref<64x128xf32, #tpu.memory_space<vmem>>, vector<1x128xf32>,
    %c9 = arith.constant 9 : index
    %36 = memref.load %arg1[%c9] : memref<64xi32, #tpu.memory_space<smem>>
    %37 = arith.index_cast %36 : i32 to index
    %c0_27 = arith.constant 0 : index
    %38 = vector.load %arg3[%37, %c0_27] : memref<28x128xf32, #tpu.memory_space<vmem>>, vector<1x128xf32>
    %c9_28 = arith.constant 9 : index
    %c0_29 = arith.constant 0 : index
    %39 = vector.load %arg10[%c9_28, %c0_29] : memref<64x128xf32, #tpu.memory_space<vmem>>, vector<1x128xf32>
    tpu.vector_store %arg10[%c9_28, %c0_29], %38 {strides = array<i32>} : memref<64x128xf32, #tpu.memory_space<vmem>>, vector<1x128xf32>,
    %c10 = arith.constant 10 : index
    %40 = memref.load %arg1[%c10] : memref<64xi32, #tpu.memory_space<smem>>
    %41 = arith.index_cast %40 : i32 to index
    %c0_30 = arith.constant 0 : index
    %42 = vector.load %arg3[%41, %c0_30] : memref<28x128xf32, #tpu.memory_space<vmem>>, vector<1x128xf32>
    %c10_31 = arith.constant 10 : index
    %c0_32 = arith.constant 0 : index
    %43 = vector.load %arg10[%c10_31, %c0_32] : memref<64x128xf32, #tpu.memory_space<vmem>>, vector<1x128xf32>
    tpu.vector_store %arg10[%c10_31, %c0_32], %42 {strides = array<i32>} : memref<64x128xf32, #tpu.memory_space<vmem>>, vector<1x128xf32>,
    %c11 = arith.constant 11 : index
    %44 = memref.load %arg1[%c11] : memref<64xi32, #tpu.memory_space<smem>>
    %45 = arith.index_cast %44 : i32 to index
    %c0_33 = arith.constant 0 : index
    %46 = vector.load %arg3[%45, %c0_33] : memref<28x128xf32, #tpu.memory_space<vmem>>, vector<1x128xf32>
    %c11_34 = arith.constant 11 : index
    %c0_35 = arith.constant 0 : index
    %47 = vector.load %arg10[%c11_34, %c0_35] : memref<64x128xf32, #tpu.memory_space<vmem>>, vector<1x128xf32>
    tpu.vector_store %arg10[%c11_34, %c0_35], %46 {strides = array<i32>} : memref<64x128xf32, #tpu.memory_space<vmem>>, vector<1x128xf32>,
    %c12 = arith.constant 12 : index
    %48 = memref.load %arg1[%c12] : memref<64xi32, #tpu.memory_space<smem>>
    %49 = arith.index_cast %48 : i32 to index
    %c0_36 = arith.constant 0 : index
    %50 = vector.load %arg3[%49, %c0_36] : memref<28x128xf32, #tpu.memory_space<vmem>>, vector<1x128xf32>
    %c12_37 = arith.constant 12 : index
    %c0_38 = arith.constant 0 : index
    %51 = vector.load %arg10[%c12_37, %c0_38] : memref<64x128xf32, #tpu.memory_space<vmem>>, vector<1x128xf32>
    tpu.vector_store %arg10[%c12_37, %c0_38], %50 {strides = array<i32>} : memref<64x128xf32, #tpu.memory_space<vmem>>, vector<1x128xf32>,
    %c13 = arith.constant 13 : index
    %52 = memref.load %arg1[%c13] : memref<64xi32, #tpu.memory_space<smem>>
    %53 = arith.index_cast %52 : i32 to index
    %c0_39 = arith.constant 0 : index
    %54 = vector.load %arg3[%53, %c0_39] : memref<28x128xf32, #tpu.memory_space<vmem>>, vector<1x128xf32>
    %c13_40 = arith.constant 13 : index
    %c0_41 = arith.constant 0 : index
    %55 = vector.load %arg10[%c13_40, %c0_41] : memref<64x128xf32, #tpu.memory_space<vmem>>, vector<1x128xf32>
    tpu.vector_store %arg10[%c13_40, %c0_41], %54 {strides = array<i32>} : memref<64x128xf32, #tpu.memory_space<vmem>>, vector<1x128xf32>,
    %c14 = arith.constant 14 : index
    %56 = memref.load %arg1[%c14] : memref<64xi32, #tpu.memory_space<smem>>
    %57 = arith.index_cast %56 : i32 to index
    %c0_42 = arith.constant 0 : index
    %58 = vector.load %arg3[%57, %c0_42] : memref<28x128xf32, #tpu.memory_space<vmem>>, vector<1x128xf32>
    %c14_43 = arith.constant 14 : index
    %c0_44 = arith.constant 0 : index
    %59 = vector.load %arg10[%c14_43, %c0_44] : memref<64x128xf32, #tpu.memory_space<vmem>>, vector<1x128xf32>
    tpu.vector_store %arg10[%c14_43, %c0_44], %58 {strides = array<i32>} : memref<64x128xf32, #tpu.memory_space<vmem>>, vector<1x128xf32>,
    %c15 = arith.constant 15 : index
    %60 = memref.load %arg1[%c15] : memref<64xi32, #tpu.memory_space<smem>>
    %61 = arith.index_cast %60 : i32 to index
    %c0_45 = arith.constant 0 : index
    %62 = vector.load %arg3[%61, %c0_45] : memref<28x128xf32, #tpu.memory_space<vmem>>, vector<1x128xf32>
    %c15_46 = arith.constant 15 : index
    %c0_47 = arith.constant 0 : index
    %63 = vector.load %arg10[%c15_46, %c0_47] : memref<64x128xf32, #tpu.memory_space<vmem>>, vector<1x128xf32>
    tpu.vector_store %arg10[%c15_46, %c0_47], %62 {strides = array<i32>} : memref<64x128xf32, #tpu.memory_space<vmem>>, vector<1x128xf32>,
    %c16 = arith.constant 16 : index
    %64 = memref.load %arg1[%c16] : memref<64xi32, #tpu.memory_space<smem>>
    %65 = arith.index_cast %64 : i32 to index
    %c0_48 = arith.constant 0 : index
    %66 = vector.load %arg3[%65, %c0_48] : memref<28x128xf32, #tpu.memory_space<vmem>>, vector<1x128xf32>
    %c16_49 = arith.constant 16 : index
    %c0_50 = arith.constant 0 : index
    %67 = vector.load %arg10[%c16_49, %c0_50] : memref<64x128xf32, #tpu.memory_space<vmem>>, vector<1x128xf32>
    tpu.vector_store %arg10[%c16_49, %c0_50], %66 {strides = array<i32>} : memref<64x128xf32, #tpu.memory_space<vmem>>, vector<1x128xf32>,
    %c17 = arith.constant 17 : index
    %68 = memref.load %arg1[%c17] : memref<64xi32, #tpu.memory_space<smem>>
    %69 = arith.index_cast %68 : i32 to index
    %c0_51 = arith.constant 0 : index
    %70 = vector.load %arg3[%69, %c0_51] : memref<28x128xf32, #tpu.memory_space<vmem>>, vector<1x128xf32>
    %c17_52 = arith.constant 17 : index
    %c0_53 = arith.constant 0 : index
    %71 = vector.load %arg10[%c17_52, %c0_53] : memref<64x128xf32, #tpu.memory_space<vmem>>, vector<1x128xf32>
    tpu.vector_store %arg10[%c17_52, %c0_53], %70 {strides = array<i32>} : memref<64x128xf32, #tpu.memory_space<vmem>>, vector<1x128xf32>,
    %c18 = arith.constant 18 : index
    %72 = memref.load %arg1[%c18] : memref<64xi32, #tpu.memory_space<smem>>
    %73 = arith.index_cast %72 : i32 to index
    %c0_54 = arith.constant 0 : index
    %74 = vector.load %arg3[%73, %c0_54] : memref<28x128xf32, #tpu.memory_space<vmem>>, vector<1x128xf32>
    %c18_55 = arith.constant 18 : index
    %c0_56 = arith.constant 0 : index
    %75 = vector.load %arg10[%c18_55, %c0_56] : memref<64x128xf32, #tpu.memory_space<vmem>>, vector<1x128xf32>
    tpu.vector_store %arg10[%c18_55, %c0_56], %74 {strides = array<i32>} : memref<64x128xf32, #tpu.memory_space<vmem>>, vector<1x128xf32>,
    %c19 = arith.constant 19 : index
    %76 = memref.load %arg1[%c19] : memref<64xi32, #tpu.memory_space<smem>>
    %77 = arith.index_cast %76 : i32 to index
    %c0_57 = arith.constant 0 : index
    %78 = vector.load %arg3[%77, %c0_57] : memref<28x128xf32, #tpu.memory_space<vmem>>, vector<1x128xf32>
    %c19_58 = arith.constant 19 : index
    %c0_59 = arith.constant 0 : index
    %79 = vector.load %arg10[%c19_58, %c0_59] : memref<64x128xf32, #tpu.memory_space<vmem>>, vector<1x128xf32>
    tpu.vector_store %arg10[%c19_58, %c0_59], %78 {strides = array<i32>} : memref<64x128xf32, #tpu.memory_space<vmem>>, vector<1x128xf32>,
    %c20 = arith.constant 20 : index
    %80 = memref.load %arg1[%c20] : memref<64xi32, #tpu.memory_space<smem>>
    %81 = arith.index_cast %80 : i32 to index
    %c0_60 = arith.constant 0 : index
    %82 = vector.load %arg3[%81, %c0_60] : memref<28x128xf32, #tpu.memory_space<vmem>>, vector<1x128xf32>
    %c20_61 = arith.constant 20 : index
    %c0_62 = arith.constant 0 : index
    %83 = vector.load %arg10[%c20_61, %c0_62] : memref<64x128xf32, #tpu.memory_space<vmem>>, vector<1x128xf32>
    tpu.vector_store %arg10[%c20_61, %c0_62], %82 {strides = array<i32>} : memref<64x128xf32, #tpu.memory_space<vmem>>, vector<1x128xf32>,
    %c21 = arith.constant 21 : index
    %84 = memref.load %arg1[%c21] : memref<64xi32, #tpu.memory_space<smem>>
    %85 = arith.index_cast %84 : i32 to index
    %c0_63 = arith.constant 0 : index
    %86 = vector.load %arg3[%85, %c0_63] : memref<28x128xf32, #tpu.memory_space<vmem>>, vector<1x128xf32>
    %c21_64 = arith.constant 21 : index
    %c0_65 = arith.constant 0 : index
    %87 = vector.load %arg10[%c21_64, %c0_65] : memref<64x128xf32, #tpu.memory_space<vmem>>, vector<1x128xf32>
    tpu.vector_store %arg10[%c21_64, %c0_65], %86 {strides = array<i32>} : memref<64x128xf32, #tpu.memory_space<vmem>>, vector<1x128xf32>,
    %c22 = arith.constant 22 : index
    %88 = memref.load %arg1[%c22] : memref<64xi32, #tpu.memory_space<smem>>
    %89 = arith.index_cast %88 : i32 to index
    %c0_66 = arith.constant 0 : index
    %90 = vector.load %arg3[%89, %c0_66] : memref<28x128xf32, #tpu.memory_space<vmem>>, vector<1x128xf32>
    %c22_67 = arith.constant 22 : index
    %c0_68 = arith.constant 0 : index
    %91 = vector.load %arg10[%c22_67, %c0_68] : memref<64x128xf32, #tpu.memory_space<vmem>>, vector<1x128xf32>
    tpu.vector_store %arg10[%c22_67, %c0_68], %90 {strides = array<i32>} : memref<64x128xf32, #tpu.memory_space<vmem>>, vector<1x128xf32>,
    %c23 = arith.constant 23 : index
    %92 = memref.load %arg1[%c23] : memref<64xi32, #tpu.memory_space<smem>>
    %93 = arith.index_cast %92 : i32 to index
    %c0_69 = arith.constant 0 : index
    %94 = vector.load %arg3[%93, %c0_69] : memref<28x128xf32, #tpu.memory_space<vmem>>, vector<1x128xf32>
    %c23_70 = arith.constant 23 : index
    %c0_71 = arith.constant 0 : index
    %95 = vector.load %arg10[%c23_70, %c0_71] : memref<64x128xf32, #tpu.memory_space<vmem>>, vector<1x128xf32>
    tpu.vector_store %arg10[%c23_70, %c0_71], %94 {strides = array<i32>} : memref<64x128xf32, #tpu.memory_space<vmem>>, vector<1x128xf32>,
    %c24 = arith.constant 24 : index
    %96 = memref.load %arg1[%c24] : memref<64xi32, #tpu.memory_space<smem>>
    %97 = arith.index_cast %96 : i32 to index
    %c0_72 = arith.constant 0 : index
    %98 = vector.load %arg3[%97, %c0_72] : memref<28x128xf32, #tpu.memory_space<vmem>>, vector<1x128xf32>
    %c24_73 = arith.constant 24 : index
    %c0_74 = arith.constant 0 : index
    %99 = vector.load %arg10[%c24_73, %c0_74] : memref<64x128xf32, #tpu.memory_space<vmem>>, vector<1x128xf32>
    tpu.vector_store %arg10[%c24_73, %c0_74], %98 {strides = array<i32>} : memref<64x128xf32, #tpu.memory_space<vmem>>, vector<1x128xf32>,
    %c25 = arith.constant 25 : index
    %100 = memref.load %arg1[%c25] : memref<64xi32, #tpu.memory_space<smem>>
    %101 = arith.index_cast %100 : i32 to index
    %c0_75 = arith.constant 0 : index
    %102 = vector.load %arg3[%101, %c0_75] : memref<28x128xf32, #tpu.memory_space<vmem>>, vector<1x128xf32>
    %c25_76 = arith.constant 25 : index
    %c0_77 = arith.constant 0 : index
    %103 = vector.load %arg10[%c25_76, %c0_77] : memref<64x128xf32, #tpu.memory_space<vmem>>, vector<1x128xf32>
    tpu.vector_store %arg10[%c25_76, %c0_77], %102 {strides = array<i32>} : memref<64x128xf32, #tpu.memory_space<vmem>>, vector<1x128xf32>,
    %c26 = arith.constant 26 : index
    %104 = memref.load %arg1[%c26] : memref<64xi32, #tpu.memory_space<smem>>
    %105 = arith.index_cast %104 : i32 to index
    %c0_78 = arith.constant 0 : index
    %106 = vector.load %arg3[%105, %c0_78] : memref<28x128xf32, #tpu.memory_space<vmem>>, vector<1x128xf32>
    %c26_79 = arith.constant 26 : index
    %c0_80 = arith.constant 0 : index
    %107 = vector.load %arg10[%c26_79, %c0_80] : memref<64x128xf32, #tpu.memory_space<vmem>>, vector<1x128xf32>
    tpu.vector_store %arg10[%c26_79, %c0_80], %106 {strides = array<i32>} : memref<64x128xf32, #tpu.memory_space<vmem>>, vector<1x128xf32>,
    %c27 = arith.constant 27 : index
    %108 = memref.load %arg1[%c27] : memref<64xi32, #tpu.memory_space<smem>>
    %109 = arith.index_cast %108 : i32 to index
    %c0_81 = arith.constant 0 : index
    %110 = vector.load %arg3[%109, %c0_81] : memref<28x128xf32, #tpu.memory_space<vmem>>, vector<1x128xf32>
    %c27_82 = arith.constant 27 : index
    %c0_83 = arith.constant 0 : index
    %111 = vector.load %arg10[%c27_82, %c0_83] : memref<64x128xf32, #tpu.memory_space<vmem>>, vector<1x128xf32>
    tpu.vector_store %arg10[%c27_82, %c0_83], %110 {strides = array<i32>} : memref<64x128xf32, #tpu.memory_space<vmem>>, vector<1x128xf32>,
    %c28 = arith.constant 28 : index
    %112 = memref.load %arg1[%c28] : memref<64xi32, #tpu.memory_space<smem>>
    %113 = arith.index_cast %112 : i32 to index
    %c0_84 = arith.constant 0 : index
    %114 = vector.load %arg3[%113, %c0_84] : memref<28x128xf32, #tpu.memory_space<vmem>>, vector<1x128xf32>
    %c28_85 = arith.constant 28 : index
    %c0_86 = arith.constant 0 : index
    %115 = vector.load %arg10[%c28_85, %c0_86] : memref<64x128xf32, #tpu.memory_space<vmem>>, vector<1x128xf32>
    tpu.vector_store %arg10[%c28_85, %c0_86], %114 {strides = array<i32>} : memref<64x128xf32, #tpu.memory_space<vmem>>, vector<1x128xf32>,
    %c29 = arith.constant 29 : index
    %116 = memref.load %arg1[%c29] : memref<64xi32, #tpu.memory_space<smem>>
    %117 = arith.index_cast %116 : i32 to index
    %c0_87 = arith.constant 0 : index
    %118 = vector.load %arg3[%117, %c0_87] : memref<28x128xf32, #tpu.memory_space<vmem>>, vector<1x128xf32>
    %c29_88 = arith.constant 29 : index
    %c0_89 = arith.constant 0 : index
    %119 = vector.load %arg10[%c29_88, %c0_89] : memref<64x128xf32, #tpu.memory_space<vmem>>, vector<1x128xf32>
    tpu.vector_store %arg10[%c29_88, %c0_89], %118 {strides = array<i32>} : memref<64x128xf32, #tpu.memory_space<vmem>>, vector<1x128xf32>,
    %c30 = arith.constant 30 : index
    %120 = memref.load %arg1[%c30] : memref<64xi32, #tpu.memory_space<smem>>
    %121 = arith.index_cast %120 : i32 to index
    %c0_90 = arith.constant 0 : index
    %122 = vector.load %arg3[%121, %c0_90] : memref<28x128xf32, #tpu.memory_space<vmem>>, vector<1x128xf32>
    %c30_91 = arith.constant 30 : index
    %c0_92 = arith.constant 0 : index
    %123 = vector.load %arg10[%c30_91, %c0_92] : memref<64x128xf32, #tpu.memory_space<vmem>>, vector<1x128xf32>
    tpu.vector_store %arg10[%c30_91, %c0_92], %122 {strides = array<i32>} : memref<64x128xf32, #tpu.memory_space<vmem>>, vector<1x128xf32>,
    %c31 = arith.constant 31 : index
    %124 = memref.load %arg1[%c31] : memref<64xi32, #tpu.memory_space<smem>>
    %125 = arith.index_cast %124 : i32 to index
    %c0_93 = arith.constant 0 : index
    %126 = vector.load %arg3[%125, %c0_93] : memref<28x128xf32, #tpu.memory_space<vmem>>, vector<1x128xf32>
    %c31_94 = arith.constant 31 : index
    %c0_95 = arith.constant 0 : index
    %127 = vector.load %arg10[%c31_94, %c0_95] : memref<64x128xf32, #tpu.memory_space<vmem>>, vector<1x128xf32>
    tpu.vector_store %arg10[%c31_94, %c0_95], %126 {strides = array<i32>} : memref<64x128xf32, #tpu.memory_space<vmem>>, vector<1x128xf32>,
    %c32 = arith.constant 32 : index
    %128 = memref.load %arg1[%c32] : memref<64xi32, #tpu.memory_space<smem>>
    %129 = arith.index_cast %128 : i32 to index
    %c0_96 = arith.constant 0 : index
    %130 = vector.load %arg3[%129, %c0_96] : memref<28x128xf32, #tpu.memory_space<vmem>>, vector<1x128xf32>
    %c32_97 = arith.constant 32 : index
    %c0_98 = arith.constant 0 : index
    %131 = vector.load %arg10[%c32_97, %c0_98] : memref<64x128xf32, #tpu.memory_space<vmem>>, vector<1x128xf32>
    tpu.vector_store %arg10[%c32_97, %c0_98], %130 {strides = array<i32>} : memref<64x128xf32, #tpu.memory_space<vmem>>, vector<1x128xf32>,
    %c33 = arith.constant 33 : index
    %132 = memref.load %arg1[%c33] : memref<64xi32, #tpu.memory_space<smem>>
    %133 = arith.index_cast %132 : i32 to index
    %c0_99 = arith.constant 0 : index
    %134 = vector.load %arg3[%133, %c0_99] : memref<28x128xf32, #tpu.memory_space<vmem>>, vector<1x128xf32>
    %c33_100 = arith.constant 33 : index
    %c0_101 = arith.constant 0 : index
    %135 = vector.load %arg10[%c33_100, %c0_101] : memref<64x128xf32, #tpu.memory_space<vmem>>, vector<1x128xf32>
    tpu.vector_store %arg10[%c33_100, %c0_101], %134 {strides = array<i32>} : memref<64x128xf32, #tpu.memory_space<vmem>>, vector<1x128xf32>,
    %c34 = arith.constant 34 : index
    %136 = memref.load %arg1[%c34] : memref<64xi32, #tpu.memory_space<smem>>
    %137 = arith.index_cast %136 : i32 to index
    %c0_102 = arith.constant 0 : index
    %138 = vector.load %arg3[%137, %c0_102] : memref<28x128xf32, #tpu.memory_space<vmem>>, vector<1x128xf32>
    %c34_103 = arith.constant 34 : index
    %c0_104 = arith.constant 0 : index
    %139 = vector.load %arg10[%c34_103, %c0_104] : memref<64x128xf32, #tpu.memory_space<vmem>>, vector<1x128xf32>
    tpu.vector_store %arg10[%c34_103, %c0_104], %138 {strides = array<i32>} : memref<64x128xf32, #tpu.memory_space<vmem>>, vector<1x128xf32>,
    %c35 = arith.constant 35 : index
    %140 = memref.load %arg1[%c35] : memref<64xi32, #tpu.memory_space<smem>>
    %141 = arith.index_cast %140 : i32 to index
    %c0_105 = arith.constant 0 : index
    %142 = vector.load %arg3[%141, %c0_105] : memref<28x128xf32, #tpu.memory_space<vmem>>, vector<1x128xf32>
    %c35_106 = arith.constant 35 : index
    %c0_107 = arith.constant 0 : index
    %143 = vector.load %arg10[%c35_106, %c0_107] : memref<64x128xf32, #tpu.memory_space<vmem>>, vector<1x128xf32>
    tpu.vector_store %arg10[%c35_106, %c0_107], %142 {strides = array<i32>} : memref<64x128xf32, #tpu.memory_space<vmem>>, vector<1x128xf32>,
    %c36 = arith.constant 36 : index
    %144 = memref.load %arg1[%c36] : memref<64xi32, #tpu.memory_space<smem>>
    %145 = arith.index_cast %144 : i32 to index
    %c0_108 = arith.constant 0 : index
    %146 = vector.load %arg3[%145, %c0_108] : memref<28x128xf32, #tpu.memory_space<vmem>>, vector<1x128xf32>
    %c36_109 = arith.constant 36 : index
    %c0_110 = arith.constant 0 : index
    %147 = vector.load %arg10[%c36_109, %c0_110] : memref<64x128xf32, #tpu.memory_space<vmem>>, vector<1x128xf32>
    tpu.vector_store %arg10[%c36_109, %c0_110], %146 {strides = array<i32>} : memref<64x128xf32, #tpu.memory_space<vmem>>, vector<1x128xf32>,
    %c37 = arith.constant 37 : index
    %148 = memref.load %arg1[%c37] : memref<64xi32, #tpu.memory_space<smem>>
    %149 = arith.index_cast %148 : i32 to index
    %c0_111 = arith.constant 0 : index
    %150 = vector.load %arg3[%149, %c0_111] : memref<28x128xf32, #tpu.memory_space<vmem>>, vector<1x128xf32>
    %c37_112 = arith.constant 37 : index
    %c0_113 = arith.constant 0 : index
    %151 = vector.load %arg10[%c37_112, %c0_113] : memref<64x128xf32, #tpu.memory_space<vmem>>, vector<1x128xf32>
    tpu.vector_store %arg10[%c37_112, %c0_113], %150 {strides = array<i32>} : memref<64x128xf32, #tpu.memory_space<vmem>>, vector<1x128xf32>,
    %c38 = arith.constant 38 : index
    %152 = memref.load %arg1[%c38] : memref<64xi32, #tpu.memory_space<smem>>
    %153 = arith.index_cast %152 : i32 to index
    %c0_114 = arith.constant 0 : index
    %154 = vector.load %arg3[%153, %c0_114] : memref<28x128xf32, #tpu.memory_space<vmem>>, vector<1x128xf32>
    %c38_115 = arith.constant 38 : index
    %c0_116 = arith.constant 0 : index
    %155 = vector.load %arg10[%c38_115, %c0_116] : memref<64x128xf32, #tpu.memory_space<vmem>>, vector<1x128xf32>
    tpu.vector_store %arg10[%c38_115, %c0_116], %154 {strides = array<i32>} : memref<64x128xf32, #tpu.memory_space<vmem>>, vector<1x128xf32>,
    %c39 = arith.constant 39 : index
    %156 = memref.load %arg1[%c39] : memref<64xi32, #tpu.memory_space<smem>>
    %157 = arith.index_cast %156 : i32 to index
    %c0_117 = arith.constant 0 : index
    %158 = vector.load %arg3[%157, %c0_117] : memref<28x128xf32, #tpu.memory_space<vmem>>, vector<1x128xf32>
    %c39_118 = arith.constant 39 : index
    %c0_119 = arith.constant 0 : index
    %159 = vector.load %arg10[%c39_118, %c0_119] : memref<64x128xf32, #tpu.memory_space<vmem>>, vector<1x128xf32>
    tpu.vector_store %arg10[%c39_118, %c0_119], %158 {strides = array<i32>} : memref<64x128xf32, #tpu.memory_space<vmem>>, vector<1x128xf32>,
    %c40 = arith.constant 40 : index
    %160 = memref.load %arg1[%c40] : memref<64xi32, #tpu.memory_space<smem>>
    %161 = arith.index_cast %160 : i32 to index
    %c0_120 = arith.constant 0 : index
    %162 = vector.load %arg3[%161, %c0_120] : memref<28x128xf32, #tpu.memory_space<vmem>>, vector<1x128xf32>
    %c40_121 = arith.constant 40 : index
    %c0_122 = arith.constant 0 : index
    %163 = vector.load %arg10[%c40_121, %c0_122] : memref<64x128xf32, #tpu.memory_space<vmem>>, vector<1x128xf32>
    tpu.vector_store %arg10[%c40_121, %c0_122], %162 {strides = array<i32>} : memref<64x128xf32, #tpu.memory_space<vmem>>, vector<1x128xf32>,
    %c41 = arith.constant 41 : index
    %164 = memref.load %arg1[%c41] : memref<64xi32, #tpu.memory_space<smem>>
    %165 = arith.index_cast %164 : i32 to index
    %c0_123 = arith.constant 0 : index
    %166 = vector.load %arg3[%165, %c0_123] : memref<28x128xf32, #tpu.memory_space<vmem>>, vector<1x128xf32>
    %c41_124 = arith.constant 41 : index
    %c0_125 = arith.constant 0 : index
    %167 = vector.load %arg10[%c41_124, %c0_125] : memref<64x128xf32, #tpu.memory_space<vmem>>, vector<1x128xf32>
    tpu.vector_store %arg10[%c41_124, %c0_125], %166 {strides = array<i32>} : memref<64x128xf32, #tpu.memory_space<vmem>>, vector<1x128xf32>,
    %c42 = arith.constant 42 : index
    %168 = memref.load %arg1[%c42] : memref<64xi32, #tpu.memory_space<smem>>
    %169 = arith.index_cast %168 : i32 to index
    %c0_126 = arith.constant 0 : index
    %170 = vector.load %arg3[%169, %c0_126] : memref<28x128xf32, #tpu.memory_space<vmem>>, vector<1x128xf32>
    %c42_127 = arith.constant 42 : index
    %c0_128 = arith.constant 0 : index
    %171 = vector.load %arg10[%c42_127, %c0_128] : memref<64x128xf32, #tpu.memory_space<vmem>>, vector<1x128xf32>
    tpu.vector_store %arg10[%c42_127, %c0_128], %170 {strides = array<i32>} : memref<64x128xf32, #tpu.memory_space<vmem>>, vector<1x128xf32>,
    %c43 = arith.constant 43 : index
    %172 = memref.load %arg1[%c43] : memref<64xi32, #tpu.memory_space<smem>>
    %173 = arith.index_cast %172 : i32 to index
    %c0_129 = arith.constant 0 : index
    %174 = vector.load %arg3[%173, %c0_129] : memref<28x128xf32, #tpu.memory_space<vmem>>, vector<1x128xf32>
    %c43_130 = arith.constant 43 : index
    %c0_131 = arith.constant 0 : index
    %175 = vector.load %arg10[%c43_130, %c0_131] : memref<64x128xf32, #tpu.memory_space<vmem>>, vector<1x128xf32>
    tpu.vector_store %arg10[%c43_130, %c0_131], %174 {strides = array<i32>} : memref<64x128xf32, #tpu.memory_space<vmem>>, vector<1x128xf32>,
    %c44 = arith.constant 44 : index
    %176 = memref.load %arg1[%c44] : memref<64xi32, #tpu.memory_space<smem>>
    %177 = arith.index_cast %176 : i32 to index
    %c0_132 = arith.constant 0 : index
    %178 = vector.load %arg3[%177, %c0_132] : memref<28x128xf32, #tpu.memory_space<vmem>>, vector<1x128xf32>
    %c44_133 = arith.constant 44 : index
    %c0_134 = arith.constant 0 : index
    %179 = vector.load %arg10[%c44_133, %c0_134] : memref<64x128xf32, #tpu.memory_space<vmem>>, vector<1x128xf32>
    tpu.vector_store %arg10[%c44_133, %c0_134], %178 {strides = array<i32>} : memref<64x128xf32, #tpu.memory_space<vmem>>, vector<1x128xf32>,
    %c45 = arith.constant 45 : index
    %180 = memref.load %arg1[%c45] : memref<64xi32, #tpu.memory_space<smem>>
    %181 = arith.index_cast %180 : i32 to index
    %c0_135 = arith.constant 0 : index
    %182 = vector.load %arg3[%181, %c0_135] : memref<28x128xf32, #tpu.memory_space<vmem>>, vector<1x128xf32>
    %c45_136 = arith.constant 45 : index
    %c0_137 = arith.constant 0 : index
    %183 = vector.load %arg10[%c45_136, %c0_137] : memref<64x128xf32, #tpu.memory_space<vmem>>, vector<1x128xf32>
    tpu.vector_store %arg10[%c45_136, %c0_137], %182 {strides = array<i32>} : memref<64x128xf32, #tpu.memory_space<vmem>>, vector<1x128xf32>,
    %c46 = arith.constant 46 : index
    %184 = memref.load %arg1[%c46] : memref<64xi32, #tpu.memory_space<smem>>
    %185 = arith.index_cast %184 : i32 to index
    %c0_138 = arith.constant 0 : index
    %186 = vector.load %arg3[%185, %c0_138] : memref<28x128xf32, #tpu.memory_space<vmem>>, vector<1x128xf32>
    %c46_139 = arith.constant 46 : index
    %c0_140 = arith.constant 0 : index
    %187 = vector.load %arg10[%c46_139, %c0_140] : memref<64x128xf32, #tpu.memory_space<vmem>>, vector<1x128xf32>
    tpu.vector_store %arg10[%c46_139, %c0_140], %186 {strides = array<i32>} : memref<64x128xf32, #tpu.memory_space<vmem>>, vector<1x128xf32>,
    %c47 = arith.constant 47 : index
    %188 = memref.load %arg1[%c47] : memref<64xi32, #tpu.memory_space<smem>>
    %189 = arith.index_cast %188 : i32 to index
    %c0_141 = arith.constant 0 : index
    %190 = vector.load %arg3[%189, %c0_141] : memref<28x128xf32, #tpu.memory_space<vmem>>, vector<1x128xf32>
    %c47_142 = arith.constant 47 : index
    %c0_143 = arith.constant 0 : index
    %191 = vector.load %arg10[%c47_142, %c0_143] : memref<64x128xf32, #tpu.memory_space<vmem>>, vector<1x128xf32>
    tpu.vector_store %arg10[%c47_142, %c0_143], %190 {strides = array<i32>} : memref<64x128xf32, #tpu.memory_space<vmem>>, vector<1x128xf32>,
    %c48 = arith.constant 48 : index
    %192 = memref.load %arg1[%c48] : memref<64xi32, #tpu.memory_space<smem>>
    %193 = arith.index_cast %192 : i32 to index
    %c0_144 = arith.constant 0 : index
    %194 = vector.load %arg3[%193, %c0_144] : memref<28x128xf32, #tpu.memory_space<vmem>>, vector<1x128xf32>
    %c48_145 = arith.constant 48 : index
    %c0_146 = arith.constant 0 : index
    %195 = vector.load %arg10[%c48_145, %c0_146] : memref<64x128xf32, #tpu.memory_space<vmem>>, vector<1x128xf32>
    tpu.vector_store %arg10[%c48_145, %c0_146], %194 {strides = array<i32>} : memref<64x128xf32, #tpu.memory_space<vmem>>, vector<1x128xf32>,
    %c49 = arith.constant 49 : index
    %196 = memref.load %arg1[%c49] : memref<64xi32, #tpu.memory_space<smem>>
    %197 = arith.index_cast %196 : i32 to index
    %c0_147 = arith.constant 0 : index
    %198 = vector.load %arg3[%197, %c0_147] : memref<28x128xf32, #tpu.memory_space<vmem>>, vector<1x128xf32>
    %c49_148 = arith.constant 49 : index
    %c0_149 = arith.constant 0 : index
    %199 = vector.load %arg10[%c49_148, %c0_149] : memref<64x128xf32, #tpu.memory_space<vmem>>, vector<1x128xf32>
    tpu.vector_store %arg10[%c49_148, %c0_149], %198 {strides = array<i32>} : memref<64x128xf32, #tpu.memory_space<vmem>>, vector<1x128xf32>,
    %c50 = arith.constant 50 : index
    %200 = memref.load %arg1[%c50] : memref<64xi32, #tpu.memory_space<smem>>
    %201 = arith.index_cast %200 : i32 to index
    %c0_150 = arith.constant 0 : index
    %202 = vector.load %arg3[%201, %c0_150] : memref<28x128xf32, #tpu.memory_space<vmem>>, vector<1x128xf32>
    %c50_151 = arith.constant 50 : index
    %c0_152 = arith.constant 0 : index
    %203 = vector.load %arg10[%c50_151, %c0_152] : memref<64x128xf32, #tpu.memory_space<vmem>>, vector<1x128xf32>
    tpu.vector_store %arg10[%c50_151, %c0_152], %202 {strides = array<i32>} : memref<64x128xf32, #tpu.memory_space<vmem>>, vector<1x128xf32>,
    %c51 = arith.constant 51 : index
    %204 = memref.load %arg1[%c51] : memref<64xi32, #tpu.memory_space<smem>>
    %205 = arith.index_cast %204 : i32 to index
    %c0_153 = arith.constant 0 : index
    %206 = vector.load %arg3[%205, %c0_153] : memref<28x128xf32, #tpu.memory_space<vmem>>, vector<1x128xf32>
    %c51_154 = arith.constant 51 : index
    %c0_155 = arith.constant 0 : index
    %207 = vector.load %arg10[%c51_154, %c0_155] : memref<64x128xf32, #tpu.memory_space<vmem>>, vector<1x128xf32>
    tpu.vector_store %arg10[%c51_154, %c0_155], %206 {strides = array<i32>} : memref<64x128xf32, #tpu.memory_space<vmem>>, vector<1x128xf32>,
    %c52 = arith.constant 52 : index
    %208 = memref.load %arg1[%c52] : memref<64xi32, #tpu.memory_space<smem>>
    %209 = arith.index_cast %208 : i32 to index
    %c0_156 = arith.constant 0 : index
    %210 = vector.load %arg3[%209, %c0_156] : memref<28x128xf32, #tpu.memory_space<vmem>>, vector<1x128xf32>
    %c52_157 = arith.constant 52 : index
    %c0_158 = arith.constant 0 : index
    %211 = vector.load %arg10[%c52_157, %c0_158] : memref<64x128xf32, #tpu.memory_space<vmem>>, vector<1x128xf32>
    tpu.vector_store %arg10[%c52_157, %c0_158], %210 {strides = array<i32>} : memref<64x128xf32, #tpu.memory_space<vmem>>, vector<1x128xf32>,
    %c53 = arith.constant 53 : index
    %212 = memref.load %arg1[%c53] : memref<64xi32, #tpu.memory_space<smem>>
    %213 = arith.index_cast %212 : i32 to index
    %c0_159 = arith.constant 0 : index
    %214 = vector.load %arg3[%213, %c0_159] : memref<28x128xf32, #tpu.memory_space<vmem>>, vector<1x128xf32>
    %c53_160 = arith.constant 53 : index
    %c0_161 = arith.constant 0 : index
    %215 = vector.load %arg10[%c53_160, %c0_161] : memref<64x128xf32, #tpu.memory_space<vmem>>, vector<1x128xf32>
    tpu.vector_store %arg10[%c53_160, %c0_161], %214 {strides = array<i32>} : memref<64x128xf32, #tpu.memory_space<vmem>>, vector<1x128xf32>,
    %c54 = arith.constant 54 : index
    %216 = memref.load %arg1[%c54] : memref<64xi32, #tpu.memory_space<smem>>
    %217 = arith.index_cast %216 : i32 to index
    %c0_162 = arith.constant 0 : index
    %218 = vector.load %arg3[%217, %c0_162] : memref<28x128xf32, #tpu.memory_space<vmem>>, vector<1x128xf32>
    %c54_163 = arith.constant 54 : index
    %c0_164 = arith.constant 0 : index
    %219 = vector.load %arg10[%c54_163, %c0_164] : memref<64x128xf32, #tpu.memory_space<vmem>>, vector<1x128xf32>
    tpu.vector_store %arg10[%c54_163, %c0_164], %218 {strides = array<i32>} : memref<64x128xf32, #tpu.memory_space<vmem>>, vector<1x128xf32>,
    %c55 = arith.constant 55 : index
    %220 = memref.load %arg1[%c55] : memref<64xi32, #tpu.memory_space<smem>>
    %221 = arith.index_cast %220 : i32 to index
    %c0_165 = arith.constant 0 : index
    %222 = vector.load %arg3[%221, %c0_165] : memref<28x128xf32, #tpu.memory_space<vmem>>, vector<1x128xf32>
    %c55_166 = arith.constant 55 : index
    %c0_167 = arith.constant 0 : index
    %223 = vector.load %arg10[%c55_166, %c0_167] : memref<64x128xf32, #tpu.memory_space<vmem>>, vector<1x128xf32>
    tpu.vector_store %arg10[%c55_166, %c0_167], %222 {strides = array<i32>} : memref<64x128xf32, #tpu.memory_space<vmem>>, vector<1x128xf32>,
    %c56 = arith.constant 56 : index
    %224 = memref.load %arg1[%c56] : memref<64xi32, #tpu.memory_space<smem>>
    %225 = arith.index_cast %224 : i32 to index
    %c0_168 = arith.constant 0 : index
    %226 = vector.load %arg3[%225, %c0_168] : memref<28x128xf32, #tpu.memory_space<vmem>>, vector<1x128xf32>
    %c56_169 = arith.constant 56 : index
    %c0_170 = arith.constant 0 : index
    %227 = vector.load %arg10[%c56_169, %c0_170] : memref<64x128xf32, #tpu.memory_space<vmem>>, vector<1x128xf32>
    tpu.vector_store %arg10[%c56_169, %c0_170], %226 {strides = array<i32>} : memref<64x128xf32, #tpu.memory_space<vmem>>, vector<1x128xf32>,
    %c57 = arith.constant 57 : index
    %228 = memref.load %arg1[%c57] : memref<64xi32, #tpu.memory_space<smem>>
    %229 = arith.index_cast %228 : i32 to index
    %c0_171 = arith.constant 0 : index
    %230 = vector.load %arg3[%229, %c0_171] : memref<28x128xf32, #tpu.memory_space<vmem>>, vector<1x128xf32>
    %c57_172 = arith.constant 57 : index
    %c0_173 = arith.constant 0 : index
    %231 = vector.load %arg10[%c57_172, %c0_173] : memref<64x128xf32, #tpu.memory_space<vmem>>, vector<1x128xf32>
    tpu.vector_store %arg10[%c57_172, %c0_173], %230 {strides = array<i32>} : memref<64x128xf32, #tpu.memory_space<vmem>>, vector<1x128xf32>,
    %c58 = arith.constant 58 : index
    %232 = memref.load %arg1[%c58] : memref<64xi32, #tpu.memory_space<smem>>
    %233 = arith.index_cast %232 : i32 to index
    %c0_174 = arith.constant 0 : index
    %234 = vector.load %arg3[%233, %c0_174] : memref<28x128xf32, #tpu.memory_space<vmem>>, vector<1x128xf32>
    %c58_175 = arith.constant 58 : index
    %c0_176 = arith.constant 0 : index
    %235 = vector.load %arg10[%c58_175, %c0_176] : memref<64x128xf32, #tpu.memory_space<vmem>>, vector<1x128xf32>
    tpu.vector_store %arg10[%c58_175, %c0_176], %234 {strides = array<i32>} : memref<64x128xf32, #tpu.memory_space<vmem>>, vector<1x128xf32>,
    %c59 = arith.constant 59 : index
    %236 = memref.load %arg1[%c59] : memref<64xi32, #tpu.memory_space<smem>>
    %237 = arith.index_cast %236 : i32 to index
    %c0_177 = arith.constant 0 : index
    %238 = vector.load %arg3[%237, %c0_177] : memref<28x128xf32, #tpu.memory_space<vmem>>, vector<1x128xf32>
    %c59_178 = arith.constant 59 : index
    %c0_179 = arith.constant 0 : index
    %239 = vector.load %arg10[%c59_178, %c0_179] : memref<64x128xf32, #tpu.memory_space<vmem>>, vector<1x128xf32>
    tpu.vector_store %arg10[%c59_178, %c0_179], %238 {strides = array<i32>} : memref<64x128xf32, #tpu.memory_space<vmem>>, vector<1x128xf32>,
    %c60 = arith.constant 60 : index
    %240 = memref.load %arg1[%c60] : memref<64xi32, #tpu.memory_space<smem>>
    %241 = arith.index_cast %240 : i32 to index
    %c0_180 = arith.constant 0 : index
    %242 = vector.load %arg3[%241, %c0_180] : memref<28x128xf32, #tpu.memory_space<vmem>>, vector<1x128xf32>
    %c60_181 = arith.constant 60 : index
    %c0_182 = arith.constant 0 : index
    %243 = vector.load %arg10[%c60_181, %c0_182] : memref<64x128xf32, #tpu.memory_space<vmem>>, vector<1x128xf32>
    tpu.vector_store %arg10[%c60_181, %c0_182], %242 {strides = array<i32>} : memref<64x128xf32, #tpu.memory_space<vmem>>, vector<1x128xf32>,
    %c61 = arith.constant 61 : index
    %244 = memref.load %arg1[%c61] : memref<64xi32, #tpu.memory_space<smem>>
    %245 = arith.index_cast %244 : i32 to index
    %c0_183 = arith.constant 0 : index
    %246 = vector.load %arg3[%245, %c0_183] : memref<28x128xf32, #tpu.memory_space<vmem>>, vector<1x128xf32>
    %c61_184 = arith.constant 61 : index
    %c0_185 = arith.constant 0 : index
    %247 = vector.load %arg10[%c61_184, %c0_185] : memref<64x128xf32, #tpu.memory_space<vmem>>, vector<1x128xf32>
    tpu.vector_store %arg10[%c61_184, %c0_185], %246 {strides = array<i32>} : memref<64x128xf32, #tpu.memory_space<vmem>>, vector<1x128xf32>,
    %c62 = arith.constant 62 : index
    %248 = memref.load %arg1[%c62] : memref<64xi32, #tpu.memory_space<smem>>
    %249 = arith.index_cast %248 : i32 to index
    %c0_186 = arith.constant 0 : index
    %250 = vector.load %arg3[%249, %c0_186] : memref<28x128xf32, #tpu.memory_space<vmem>>, vector<1x128xf32>
    %c62_187 = arith.constant 62 : index
    %c0_188 = arith.constant 0 : index
    %251 = vector.load %arg10[%c62_187, %c0_188] : memref<64x128xf32, #tpu.memory_space<vmem>>, vector<1x128xf32>
    tpu.vector_store %arg10[%c62_187, %c0_188], %250 {strides = array<i32>} : memref<64x128xf32, #tpu.memory_space<vmem>>, vector<1x128xf32>,
    %c63 = arith.constant 63 : index
    %252 = memref.load %arg1[%c63] : memref<64xi32, #tpu.memory_space<smem>>
    %253 = arith.index_cast %252 : i32 to index
    %c0_189 = arith.constant 0 : index
    %254 = vector.load %arg3[%253, %c0_189] : memref<28x128xf32, #tpu.memory_space<vmem>>, vector<1x128xf32>
    %c63_190 = arith.constant 63 : index
    %c0_191 = arith.constant 0 : index
    %255 = vector.load %arg10[%c63_190, %c0_191] : memref<64x128xf32, #tpu.memory_space<vmem>>, vector<1x128xf32>
    tpu.vector_store %arg10[%c63_190, %c0_191], %254 {strides = array<i32>} : memref<64x128xf32, #tpu.memory_space<vmem>>, vector<1x128xf32>,
    %c0_192 = arith.constant 0 : index
    %c0_193 = arith.constant 0 : index
    %256 = vector.load %arg2[%c0_192, %c0_193] : memref<8x128xf32, #tpu.memory_space<vmem>>, vector<8x128xf32>
    %c0_194 = arith.constant 0 : index
    %c0_195 = arith.constant 0 : index
    %257 = vector.load %arg4[%c0_194, %c0_195] : memref<128x128xf32, #tpu.memory_space<vmem>>, vector<128x128xf32>
    %c0_196 = arith.constant 0 : index
    %c0_197 = arith.constant 0 : index
    %258 = vector.load %arg5[%c0_196, %c0_197] : memref<1x128xf32, #tpu.memory_space<vmem>>, vector<1x128xf32>
    %c0_198 = arith.constant 0 : index
    %c0_199 = arith.constant 0 : index
    %259 = vector.load %arg10[%c0_198, %c0_199] : memref<64x128xf32, #tpu.memory_space<vmem>>, vector<8x128xf32>
    %cst = arith.constant dense<0.000000e+00> : vector<8x128xf32>
    %260 = tpu.matmul %256, %257, %cst {dimension_numbers = #tpu.dot_dimension_numbers<[1], [0], [0], [1], [0, 0, 1, 1], [], []>} : vector<8x128xf32>, vector<128x128xf32>, vector<8x128xf32> -> vector<8x128xf32>
    %261 = arith.addf %259, %260 : vector<8x128xf32>
    %262 = vector.broadcast %258 : vector<1x128xf32> to vector<8x128xf32>
    %263 = arith.addf %261, %262 : vector<8x128xf32>
    %264 = math.tanh %263 : vector<8x128xf32>
    %c0_200 = arith.constant 0 : index
    %c0_201 = arith.constant 0 : index
    %265 = vector.load %arg10[%c0_200, %c0_201] : memref<64x128xf32, #tpu.memory_space<vmem>>, vector<8x128xf32>
    tpu.vector_store %arg10[%c0_200, %c0_201], %264 {strides = array<i32>} : memref<64x128xf32, #tpu.memory_space<vmem>>, vector<8x128xf32>,
    %c8_202 = arith.constant 8 : index
    %c0_203 = arith.constant 0 : index
    %266 = vector.load %arg10[%c8_202, %c0_203] : memref<64x128xf32, #tpu.memory_space<vmem>>, vector<8x128xf32>
    %cst_204 = arith.constant dense<0.000000e+00> : vector<8x128xf32>
    %267 = tpu.matmul %264, %257, %cst_204 {dimension_numbers = #tpu.dot_dimension_numbers<[1], [0], [0], [1], [0, 0, 1, 1], [], []>} : vector<8x128xf32>, vector<128x128xf32>, vector<8x128xf32> -> vector<8x128xf32>
    %268 = arith.addf %266, %267 : vector<8x128xf32>
    %269 = vector.broadcast %258 : vector<1x128xf32> to vector<8x128xf32>
    %270 = arith.addf %268, %269 : vector<8x128xf32>
    %271 = math.tanh %270 : vector<8x128xf32>
    %c8_205 = arith.constant 8 : index
    %c0_206 = arith.constant 0 : index
    %272 = vector.load %arg10[%c8_205, %c0_206] : memref<64x128xf32, #tpu.memory_space<vmem>>, vector<8x128xf32>
    tpu.vector_store %arg10[%c8_205, %c0_206], %271 {strides = array<i32>} : memref<64x128xf32, #tpu.memory_space<vmem>>, vector<8x128xf32>,
    %c16_207 = arith.constant 16 : index
    %c0_208 = arith.constant 0 : index
    %273 = vector.load %arg10[%c16_207, %c0_208] : memref<64x128xf32, #tpu.memory_space<vmem>>, vector<8x128xf32>
    %cst_209 = arith.constant dense<0.000000e+00> : vector<8x128xf32>
    %274 = tpu.matmul %271, %257, %cst_209 {dimension_numbers = #tpu.dot_dimension_numbers<[1], [0], [0], [1], [0, 0, 1, 1], [], []>} : vector<8x128xf32>, vector<128x128xf32>, vector<8x128xf32> -> vector<8x128xf32>
    %275 = arith.addf %273, %274 : vector<8x128xf32>
    %276 = vector.broadcast %258 : vector<1x128xf32> to vector<8x128xf32>
    %277 = arith.addf %275, %276 : vector<8x128xf32>
    %278 = math.tanh %277 : vector<8x128xf32>
    %c16_210 = arith.constant 16 : index
    %c0_211 = arith.constant 0 : index
    %279 = vector.load %arg10[%c16_210, %c0_211] : memref<64x128xf32, #tpu.memory_space<vmem>>, vector<8x128xf32>
    tpu.vector_store %arg10[%c16_210, %c0_211], %278 {strides = array<i32>} : memref<64x128xf32, #tpu.memory_space<vmem>>, vector<8x128xf32>,
    %c24_212 = arith.constant 24 : index
    %c0_213 = arith.constant 0 : index
    %280 = vector.load %arg10[%c24_212, %c0_213] : memref<64x128xf32, #tpu.memory_space<vmem>>, vector<8x128xf32>
    %cst_214 = arith.constant dense<0.000000e+00> : vector<8x128xf32>
    %281 = tpu.matmul %278, %257, %cst_214 {dimension_numbers = #tpu.dot_dimension_numbers<[1], [0], [0], [1], [0, 0, 1, 1], [], []>} : vector<8x128xf32>, vector<128x128xf32>, vector<8x128xf32> -> vector<8x128xf32>
    %282 = arith.addf %280, %281 : vector<8x128xf32>
    %283 = vector.broadcast %258 : vector<1x128xf32> to vector<8x128xf32>
    %284 = arith.addf %282, %283 : vector<8x128xf32>
    %285 = math.tanh %284 : vector<8x128xf32>
    %c24_215 = arith.constant 24 : index
    %c0_216 = arith.constant 0 : index
    %286 = vector.load %arg10[%c24_215, %c0_216] : memref<64x128xf32, #tpu.memory_space<vmem>>, vector<8x128xf32>
    tpu.vector_store %arg10[%c24_215, %c0_216], %285 {strides = array<i32>} : memref<64x128xf32, #tpu.memory_space<vmem>>, vector<8x128xf32>,
    %c32_217 = arith.constant 32 : index
    %c0_218 = arith.constant 0 : index
    %287 = vector.load %arg10[%c32_217, %c0_218] : memref<64x128xf32, #tpu.memory_space<vmem>>, vector<8x128xf32>
    %cst_219 = arith.constant dense<0.000000e+00> : vector<8x128xf32>
    %288 = tpu.matmul %285, %257, %cst_219 {dimension_numbers = #tpu.dot_dimension_numbers<[1], [0], [0], [1], [0, 0, 1, 1], [], []>} : vector<8x128xf32>, vector<128x128xf32>, vector<8x128xf32> -> vector<8x128xf32>
    %289 = arith.addf %287, %288 : vector<8x128xf32>
    %290 = vector.broadcast %258 : vector<1x128xf32> to vector<8x128xf32>
    %291 = arith.addf %289, %290 : vector<8x128xf32>
    %292 = math.tanh %291 : vector<8x128xf32>
    %c32_220 = arith.constant 32 : index
    %c0_221 = arith.constant 0 : index
    %293 = vector.load %arg10[%c32_220, %c0_221] : memref<64x128xf32, #tpu.memory_space<vmem>>, vector<8x128xf32>
    tpu.vector_store %arg10[%c32_220, %c0_221], %292 {strides = array<i32>} : memref<64x128xf32, #tpu.memory_space<vmem>>, vector<8x128xf32>,
    %c40_222 = arith.constant 40 : index
    %c0_223 = arith.constant 0 : index
    %294 = vector.load %arg10[%c40_222, %c0_223] : memref<64x128xf32, #tpu.memory_space<vmem>>, vector<8x128xf32>
    %cst_224 = arith.constant dense<0.000000e+00> : vector<8x128xf32>
    %295 = tpu.matmul %292, %257, %cst_224 {dimension_numbers = #tpu.dot_dimension_numbers<[1], [0], [0], [1], [0, 0, 1, 1], [], []>} : vector<8x128xf32>, vector<128x128xf32>, vector<8x128xf32> -> vector<8x128xf32>
    %296 = arith.addf %294, %295 : vector<8x128xf32>
    %297 = vector.broadcast %258 : vector<1x128xf32> to vector<8x128xf32>
    %298 = arith.addf %296, %297 : vector<8x128xf32>
    %299 = math.tanh %298 : vector<8x128xf32>
    %c40_225 = arith.constant 40 : index
    %c0_226 = arith.constant 0 : index
    %300 = vector.load %arg10[%c40_225, %c0_226] : memref<64x128xf32, #tpu.memory_space<vmem>>, vector<8x128xf32>
    tpu.vector_store %arg10[%c40_225, %c0_226], %299 {strides = array<i32>} : memref<64x128xf32, #tpu.memory_space<vmem>>, vector<8x128xf32>,
    %c48_227 = arith.constant 48 : index
    %c0_228 = arith.constant 0 : index
    %301 = vector.load %arg10[%c48_227, %c0_228] : memref<64x128xf32, #tpu.memory_space<vmem>>, vector<8x128xf32>
    %cst_229 = arith.constant dense<0.000000e+00> : vector<8x128xf32>
    %302 = tpu.matmul %299, %257, %cst_229 {dimension_numbers = #tpu.dot_dimension_numbers<[1], [0], [0], [1], [0, 0, 1, 1], [], []>} : vector<8x128xf32>, vector<128x128xf32>, vector<8x128xf32> -> vector<8x128xf32>
    %303 = arith.addf %301, %302 : vector<8x128xf32>
    %304 = vector.broadcast %258 : vector<1x128xf32> to vector<8x128xf32>
    %305 = arith.addf %303, %304 : vector<8x128xf32>
    %306 = math.tanh %305 : vector<8x128xf32>
    %c48_230 = arith.constant 48 : index
    %c0_231 = arith.constant 0 : index
    %307 = vector.load %arg10[%c48_230, %c0_231] : memref<64x128xf32, #tpu.memory_space<vmem>>, vector<8x128xf32>
    tpu.vector_store %arg10[%c48_230, %c0_231], %306 {strides = array<i32>} : memref<64x128xf32, #tpu.memory_space<vmem>>, vector<8x128xf32>,
    %c56_232 = arith.constant 56 : index
    %c0_233 = arith.constant 0 : index
    %308 = vector.load %arg10[%c56_232, %c0_233] : memref<64x128xf32, #tpu.memory_space<vmem>>, vector<8x128xf32>
    %cst_234 = arith.constant dense<0.000000e+00> : vector<8x128xf32>
    %309 = tpu.matmul %306, %257, %cst_234 {dimension_numbers = #tpu.dot_dimension_numbers<[1], [0], [0], [1], [0, 0, 1, 1], [], []>} : vector<8x128xf32>, vector<128x128xf32>, vector<8x128xf32> -> vector<8x128xf32>
    %310 = arith.addf %308, %309 : vector<8x128xf32>
    %311 = vector.broadcast %258 : vector<1x128xf32> to vector<8x128xf32>
    %312 = arith.addf %310, %311 : vector<8x128xf32>
    %313 = math.tanh %312 : vector<8x128xf32>
    %c56_235 = arith.constant 56 : index
    %c0_236 = arith.constant 0 : index
    %314 = vector.load %arg10[%c56_235, %c0_236] : memref<64x128xf32, #tpu.memory_space<vmem>>, vector<8x128xf32>
    tpu.vector_store %arg10[%c56_235, %c0_236], %313 {strides = array<i32>} : memref<64x128xf32, #tpu.memory_space<vmem>>, vector<8x128xf32>,
    %c0_237 = arith.constant 0 : index
    %c0_238 = arith.constant 0 : index
    %315 = vector.load %arg9[%c0_237, %c0_238] : memref<8x128xf32, #tpu.memory_space<vmem>>, vector<8x128xf32>
    tpu.vector_store %arg9[%c0_237, %c0_238], %313 {strides = array<i32>} : memref<8x128xf32, #tpu.memory_space<vmem>>, vector<8x128xf32>,
    %c0_239 = arith.constant 0 : index
    %c0_240 = arith.constant 0 : index
    %316 = vector.load %arg10[%c0_239, %c0_240] : memref<64x128xf32, #tpu.memory_space<vmem>>, vector<64x128xf32>
    %c0_241 = arith.constant 0 : index
    %c0_242 = arith.constant 0 : index
    %317 = vector.load %arg6[%c0_241, %c0_242] : memref<128x128xf32, #tpu.memory_space<vmem>>, vector<128x128xf32>
    %cst_243 = arith.constant dense<0.000000e+00> : vector<64x128xf32>
    %318 = tpu.matmul %316, %317, %cst_243 {dimension_numbers = #tpu.dot_dimension_numbers<[1], [0], [0], [1], [0, 0, 1, 1], [], []>} : vector<64x128xf32>, vector<128x128xf32>, vector<64x128xf32> -> vector<64x128xf32>
    %c0_244 = arith.constant 0 : index
    %c0_245 = arith.constant 0 : index
    %319 = vector.load %arg7[%c0_244, %c0_245] : memref<1x128xf32, #tpu.memory_space<vmem>>, vector<1x128xf32>
    %320 = vector.broadcast %319 : vector<1x128xf32> to vector<64x128xf32>
    %321 = arith.addf %318, %320 : vector<64x128xf32>
    %c0_246 = arith.constant 0 : index
    %c0_247 = arith.constant 0 : index
    %322 = vector.load %arg8[%c0_246, %c0_247] : memref<64x128xf32, #tpu.memory_space<vmem>>, vector<64x128xf32>
    tpu.vector_store %arg8[%c0_246, %c0_247], %321 {strides = array<i32>} : memref<64x128xf32, #tpu.memory_space<vmem>>, vector<64x128xf32>,
    return
  }
  func.func @transform_0(%arg0: i32, %arg1: memref<64xi32, #tpu.memory_space<smem>>) -> (i32, i32) {
    %c0_i32 = arith.constant 0 : i32
    %c0_i32_0 = arith.constant 0 : i32
    %c0_i32_1 = arith.constant 0 : i32
    return %c0_i32, %c0_i32_0 : i32, i32
  }
  func.func @transform_1(%arg0: i32, %arg1: memref<64xi32, #tpu.memory_space<smem>>) -> (i32, i32) {
    %c0_i32 = arith.constant 0 : i32
    %c0_i32_0 = arith.constant 0 : i32
    %c0_i32_1 = arith.constant 0 : i32
    return %c0_i32, %c0_i32_0 : i32, i32
  }
  func.func @transform_2(%arg0: i32, %arg1: memref<64xi32, #tpu.memory_space<smem>>) -> (i32, i32) {
    %c0_i32 = arith.constant 0 : i32
    %c0_i32_0 = arith.constant 0 : i32
    %c0_i32_1 = arith.constant 0 : i32
    return %c0_i32, %c0_i32_0 : i32, i32
  }
  func.func @transform_3(%arg0: i32, %arg1: memref<64xi32, #tpu.memory_space<smem>>) -> (i32, i32) {
    %c0_i32 = arith.constant 0 : i32
    %c0_i32_0 = arith.constant 0 : i32
    %c0_i32_1 = arith.constant 0 : i32
    return %c0_i32, %c0_i32_0 : i32, i32
  }
  func.func @transform_4(%arg0: i32, %arg1: memref<64xi32, #tpu.memory_space<smem>>) -> (i32, i32) {
    %c0_i32 = arith.constant 0 : i32
    %c0_i32_0 = arith.constant 0 : i32
    %c0_i32_1 = arith.constant 0 : i32
    return %c0_i32, %c0_i32_0 : i32, i32
  }
  func.func @transform_5(%arg0: i32, %arg1: memref<64xi32, #tpu.memory_space<smem>>) -> (i32, i32) {
    %c0_i32 = arith.constant 0 : i32
    %c0_i32_0 = arith.constant 0 : i32
    %c0_i32_1 = arith.constant 0 : i32
    return %c0_i32, %c0_i32_0 : i32, i32
  }
  func.func @transform_6(%arg0: i32, %arg1: memref<64xi32, #tpu.memory_space<smem>>) -> (i32, i32) {
    %c0_i32 = arith.constant 0 : i32
    %c0_i32_0 = arith.constant 0 : i32
    %c0_i32_1 = arith.constant 0 : i32
    return %c0_i32, %c0_i32_0 : i32, i32
  }
  func.func @transform_7(%arg0: i32, %arg1: memref<64xi32, #tpu.memory_space<smem>>) -> (i32, i32) {
    %c0_i32 = arith.constant 0 : i32
    %c0_i32_0 = arith.constant 0 : i32
    %c0_i32_1 = arith.constant 0 : i32
    return %c0_i32, %c0_i32_0 : i32, i32
  }
}

</mosaic_0001>

<llo_original>
// kernel: tpu_custom_call.1
$region0: #{tpu_custom_call.1}
  #allocation0 [shape = 'u32[]', space=smem, size = 0x4, offset = 0x4, fixed_abs, tag = 'smem constant byte address 0x4 - core index']
  #allocation1 [shape = 'u32[144,128]{1,0:T(1,128)}', space=vmem, size = 0x12000, scoped, tag = 'internal scratch']
  #allocation2 [shape = 'f32[64,128]{1,0:T(8,128)}', space=vmem, size = 0x8000, scoped, tag = 'scratch operand']
  #allocation3 [shape = 's32[1]{0}', space=sflag, size = 0x4, scoped, tag = 'scoped memory for tpu_custom_call.1']
  #allocation4 [shape = 'u8[512]{0}', space=smem, size = 0x200, scoped, tag = 'prefetched SMEM operand 0']
  %s0 = inlined_call_operand.hbm [shape: s32[64], index: 0, kind: input, shape index: {}]
  %s1 = inlined_call_operand.hbm [shape: f32[8,128], index: 1, kind: input, shape index: {}]
  %s2 = inlined_call_operand.hbm [shape: f32[28,128], index: 2, kind: input, shape index: {}]
  %s3 = inlined_call_operand.hbm [shape: f32[128,128], index: 3, kind: input, shape index: {}]
  %s4 = inlined_call_operand.vmem [shape: f32[1,128], index: 4, kind: input, shape index: {}]
  %s5 = inlined_call_operand.hbm [shape: f32[128,128], index: 5, kind: input, shape index: {}]
  %s6 = inlined_call_operand.vmem [shape: f32[1,128], index: 6, kind: input, shape index: {}]
  %s7 = inlined_call_operand.hbm [shape: f32[64,128], index: 7, kind: output, shape index: {0}]
  %s8 = inlined_call_operand.hbm [shape: f32[8,128], index: 8, kind: output, shape index: {1}]
  %9 = xla_tuple %s7, %s8
  %s10 = sld [smem:[#allocation0]]
  $region58: #{tpu_custom_call.1} parent=0
    _
  %s12 = ssub.s32 1, %s10
  %s13 = scalar_select 0, %s12, %s10
  %15 = dma.hbm_to_smem %s0, 16, [#allocation4], [#allocation3]
  %16 = dma.done [#allocation3], 16
  %17 = sfence
  $region1: #{tpu_custom_call.1} parent=0
    #allocation5 [shape = 'u8[4096]{0}', space=vmem, size = 0x1000, scoped, tag = 'input window, operand 1, single buffered']
    #allocation6 [shape = 's32[1]{0}', space=sflag, size = 0x4, scoped, tag = 'scoped memory for tpu_custom_call.1']
    #allocation7 [shape = 's32[1]{0}', space=sflag, size = 0x4, scoped, tag = 'scoped memory for tpu_custom_call.1']
    #allocation8 [shape = 'u8[16384]{0}', space=vmem, size = 0x4000, scoped, tag = 'input window, operand 2, single buffered']
    #allocation9 [shape = 's32[1]{0}', space=sflag, size = 0x4, scoped, tag = 'scoped memory for tpu_custom_call.1']
    #allocation10 [shape = 'u8[65536]{0}', space=vmem, size = 0x10000, scoped, tag = 'input window, operand 3, single buffered']
    #allocation11 [shape = 'u8[65536]{0}', space=vmem, size = 0x10000, scoped, tag = 'input window, operand 5, single buffered']
    #allocation12 [shape = 's32[1]{0}', space=sflag, size = 0x4, scoped, tag = 'scoped memory for tpu_custom_call.1']
    #allocation13 [shape = 'u8[32768]{0}', space=vmem, size = 0x8000, scoped, tag = 'output window, operand 0, single buffered']
    #allocation14 [shape = 'u8[4096]{0}', space=vmem, size = 0x1000, scoped, tag = 'output window, operand 1, single buffered']
    #allocation15 [shape = 's32[1]{0}', space=sflag, size = 0x4, scoped, tag = 'scoped memory for tpu_custom_call.1']
    %18 = vsyncpa [#allocation6], 0
    %19 = vsyncpa [#allocation9], 0
    %20 = vsyncpa [#allocation12], 0
    %21 = vsyncpa [#allocation7], 0
    %22 = vsyncpa [#allocation15], 0
    // Predicated region
    $region2: #{tpu_custom_call.1} parent=1 // pred_check
      _
    $region3: #{tpu_custom_call.1} parent=1 // pred_check_branch
      %24 = sbr.rel (0) target = $region5
    $region4: #{tpu_custom_call.1} parent=1 // pred_region
      %s26 = ssub.s32 128, 128
      %27 = vsyncadd [#allocation6], %s26
      %s29 = sshll.u32 [#allocation5], 4
      %s30 = int_to_ptr.vmem [resolvable:$true] %s29
      %32 = dma.hbm_to_vmem [thread:$0]  %s1, 128, %s30, [#allocation6]
    $region5: #{tpu_custom_call.1} parent=1 // pred_fallthru
      _
    // Predicated region
    $region6: #{tpu_custom_call.1} parent=1 // pred_check
      _
    $region7: #{tpu_custom_call.1} parent=1 // pred_check_branch
      %34 = sbr.rel (0) target = $region9
    $region8: #{tpu_custom_call.1} parent=1 // pred_region
      %s36 = ssub.s32 512, 512
      %37 = vsyncadd [#allocation9], %s36
      %s38 = sshll.u32 [#allocation8], 4
      %s39 = int_to_ptr.vmem [resolvable:$true] %s38
      %44 = dma.hbm_to_vmem [thread:$0]  %s2, 512, %s39, [#allocation9], 128, 128, 8
    $region9: #{tpu_custom_call.1} parent=1 // pred_fallthru
      _
    // Predicated region
    $region10: #{tpu_custom_call.1} parent=1 // pred_check
      _
    $region11: #{tpu_custom_call.1} parent=1 // pred_check_branch
      %46 = sbr.rel (0) target = $region13
    $region12: #{tpu_custom_call.1} parent=1 // pred_region
      %s48 = ssub.s32 2048, 2048
      %49 = vsyncadd [#allocation9], %s48
      %s50 = sshll.u32 [#allocation10], 4
      %s51 = int_to_ptr.vmem [resolvable:$true] %s50
      %56 = dma.hbm_to_vmem [thread:$0]  %s3, 2048, %s51, [#allocation9], 128, 128, 8
    $region13: #{tpu_custom_call.1} parent=1 // pred_fallthru
      _
    // Predicated region
    $region14: #{tpu_custom_call.1} parent=1 // pred_check
      _
    $region15: #{tpu_custom_call.1} parent=1 // pred_check_branch
      %58 = sbr.rel (0) target = $region17
    $region16: #{tpu_custom_call.1} parent=1 // pred_region
      _
    $region17: #{tpu_custom_call.1} parent=1 // pred_fallthru
      _
    // Predicated region
    $region18: #{tpu_custom_call.1} parent=1 // pred_check
      _
    $region19: #{tpu_custom_call.1} parent=1 // pred_check_branch
      %60 = sbr.rel (0) target = $region21
    $region20: #{tpu_custom_call.1} parent=1 // pred_region
      %s62 = ssub.s32 2048, 2048
      %63 = vsyncadd [#allocation12], %s62
      %s64 = sshll.u32 [#allocation11], 4
      %s65 = int_to_ptr.vmem [resolvable:$true] %s64
      %70 = dma.hbm_to_vmem [thread:$0]  %s5, 2048, %s65, [#allocation12], 128, 128, 8
    $region21: #{tpu_custom_call.1} parent=1 // pred_fallthru
      _
    // Predicated region
    $region22: #{tpu_custom_call.1} parent=1 // pred_check
      _
    $region23: #{tpu_custom_call.1} parent=1 // pred_check_branch
      %72 = sbr.rel (0) target = $region25
    $region24: #{tpu_custom_call.1} parent=1 // pred_region
      _
    $region25: #{tpu_custom_call.1} parent=1 // pred_fallthru
      _
    // Predicated region
    $region26: #{tpu_custom_call.1} parent=1 // pred_check
      _
    $region27: #{tpu_custom_call.1} parent=1 // pred_check_branch
      %74 = sbr.rel (0) target = $region29
    $region28: #{tpu_custom_call.1} parent=1 // pred_region
      %75 = dma.done [#allocation6], 128
    $region29: #{tpu_custom_call.1} parent=1 // pred_fallthru
      _
    // Predicated region
    $region30: #{tpu_custom_call.1} parent=1 // pred_check
      _
    $region31: #{tpu_custom_call.1} parent=1 // pred_check_branch
      %77 = sbr.rel (0) target = $region33
    $region32: #{tpu_custom_call.1} parent=1 // pred_region
      %78 = dma.done [#allocation9], 512
    $region33: #{tpu_custom_call.1} parent=1 // pred_fallthru
      _
    // Predicated region
    $region34: #{tpu_custom_call.1} parent=1 // pred_check
      _
    $region35: #{tpu_custom_call.1} parent=1 // pred_check_branch
      %80 = sbr.rel (0) target = $region37
    $region36: #{tpu_custom_call.1} parent=1 // pred_region
      %81 = dma.done [#allocation9], 2048
    $region37: #{tpu_custom_call.1} parent=1 // pred_fallthru
      _
    // Predicated region
    $region38: #{tpu_custom_call.1} parent=1 // pred_check
      _
    $region39: #{tpu_custom_call.1} parent=1 // pred_check_branch
      %83 = sbr.rel (0) target = $region41
    $region40: #{tpu_custom_call.1} parent=1 // pred_region
      %84 = dma.done [#allocation12], 2048
    $region41: #{tpu_custom_call.1} parent=1 // pred_fallthru
      _
    %s85 = sld [smem:[#allocation4]]
    %s86 = scalar_lea.vmem [#allocation8], %s85
    %v87 = vld [vmem:[%s86] sm:$0x1]
    %88 = vst [vmem:[#allocation2] sm:$0x1] %v87
    %s89 = sld [smem:[#allocation4 + $0x1]]
    %s90 = scalar_lea.vmem [#allocation8], %s89
    %v91 = vld [vmem:[%s90] sm:$0x1]
    %92 = vst [vmem:[#allocation2 + $0x1] sm:$0x1] %v91
    %s93 = sld [smem:[#allocation4 + $0x2]]
    %s94 = scalar_lea.vmem [#allocation8], %s93
    %v95 = vld [vmem:[%s94] sm:$0x1]
    %96 = vst [vmem:[#allocation2 + $0x2] sm:$0x1] %v95
    %s97 = sld [smem:[#allocation4 + $0x3]]
    %s98 = scalar_lea.vmem [#allocation8], %s97
    %v99 = vld [vmem:[%s98] sm:$0x1]
    %100 = vst [vmem:[#allocation2 + $0x3] sm:$0x1] %v99
    %s101 = sld [smem:[#allocation4 + $0x4]]
    %s102 = scalar_lea.vmem [#allocation8], %s101
    %v103 = vld [vmem:[%s102] sm:$0x1]
    %104 = vst [vmem:[#allocation2 + $0x4] sm:$0x1] %v103
    %s105 = sld [smem:[#allocation4 + $0x5]]
    %s106 = scalar_lea.vmem [#allocation8], %s105
    %v107 = vld [vmem:[%s106] sm:$0x1]
    %108 = vst [vmem:[#allocation2 + $0x5] sm:$0x1] %v107
    %s109 = sld [smem:[#allocation4 + $0x6]]
    %s110 = scalar_lea.vmem [#allocation8], %s109
    %v111 = vld [vmem:[%s110] sm:$0x1]
    %112 = vst [vmem:[#allocation2 + $0x6] sm:$0x1] %v111
    %s113 = sld [smem:[#allocation4 + $0x7]]
    %s114 = scalar_lea.vmem [#allocation8], %s113
    %v115 = vld [vmem:[%s114] sm:$0x1]
    %116 = vst [vmem:[#allocation2 + $0x7] sm:$0x1] %v115
    %s117 = sld [smem:[#allocation4 + $0x8]]
    %s118 = scalar_lea.vmem [#allocation8], %s117
    %v119 = vld [vmem:[%s118] sm:$0x1]
    %120 = vst [vmem:[#allocation2 + $0x8] sm:$0x1] %v119
    %s121 = sld [smem:[#allocation4 + $0x9]]
    %s122 = scalar_lea.vmem [#allocation8], %s121
    %v123 = vld [vmem:[%s122] sm:$0x1]
    %124 = vst [vmem:[#allocation2 + $0x9] sm:$0x1] %v123
    %s125 = sld [smem:[#allocation4 + $0xa]]
    %s126 = scalar_lea.vmem [#allocation8], %s125
    %v127 = vld [vmem:[%s126] sm:$0x1]
    %128 = vst [vmem:[#allocation2 + $0xa] sm:$0x1] %v127
    %s129 = sld [smem:[#allocation4 + $0xb]]
    %s130 = scalar_lea.vmem [#allocation8], %s129
    %v131 = vld [vmem:[%s130] sm:$0x1]
    %132 = vst [vmem:[#allocation2 + $0xb] sm:$0x1] %v131
    %s133 = sld [smem:[#allocation4 + $0xc]]
    %s134 = scalar_lea.vmem [#allocation8], %s133
    %v135 = vld [vmem:[%s134] sm:$0x1]
    %136 = vst [vmem:[#allocation2 + $0xc] sm:$0x1] %v135
    %s137 = sld [smem:[#allocation4 + $0xd]]
    %s138 = scalar_lea.vmem [#allocation8], %s137
    %v139 = vld [vmem:[%s138] sm:$0x1]
    %140 = vst [vmem:[#allocation2 + $0xd] sm:$0x1] %v139
    %s141 = sld [smem:[#allocation4 + $0xe]]
    %s142 = scalar_lea.vmem [#allocation8], %s141
    %v143 = vld [vmem:[%s142] sm:$0x1]
    %144 = vst [vmem:[#allocation2 + $0xe] sm:$0x1] %v143
    %s145 = sld [smem:[#allocation4 + $0xf]]
    %s146 = scalar_lea.vmem [#allocation8], %s145
    %v147 = vld [vmem:[%s146] sm:$0x1]
    %148 = vst [vmem:[#allocation2 + $0xf] sm:$0x1] %v147
    %s149 = sld [smem:[#allocation4 + $0x10]]
    %s150 = scalar_lea.vmem [#allocation8], %s149
    %v151 = vld [vmem:[%s150] sm:$0x1]
    %152 = vst [vmem:[#allocation2 + $0x10] sm:$0x1] %v151
    %s153 = sld [smem:[#allocation4 + $0x11]]
    %s154 = scalar_lea.vmem [#allocation8], %s153
    %v155 = vld [vmem:[%s154] sm:$0x1]
    %156 = vst [vmem:[#allocation2 + $0x11] sm:$0x1] %v155
    %s157 = sld [smem:[#allocation4 + $0x12]]
    %s158 = scalar_lea.vmem [#allocation8], %s157
    %v159 = vld [vmem:[%s158] sm:$0x1]
    %160 = vst [vmem:[#allocation2 + $0x12] sm:$0x1] %v159
    %s161 = sld [smem:[#allocation4 + $0x13]]
    %s162 = scalar_lea.vmem [#allocation8], %s161
    %v163 = vld [vmem:[%s162] sm:$0x1]
    %164 = vst [vmem:[#allocation2 + $0x13] sm:$0x1] %v163
    %s165 = sld [smem:[#allocation4 + $0x14]]
    %s166 = scalar_lea.vmem [#allocation8], %s165
    %v167 = vld [vmem:[%s166] sm:$0x1]
    %168 = vst [vmem:[#allocation2 + $0x14] sm:$0x1] %v167
    %s169 = sld [smem:[#allocation4 + $0x15]]
    %s170 = scalar_lea.vmem [#allocation8], %s169
    %v171 = vld [vmem:[%s170] sm:$0x1]
    %172 = vst [vmem:[#allocation2 + $0x15] sm:$0x1] %v171
    %s173 = sld [smem:[#allocation4 + $0x16]]
    %s174 = scalar_lea.vmem [#allocation8], %s173
    %v175 = vld [vmem:[%s174] sm:$0x1]
    %176 = vst [vmem:[#allocation2 + $0x16] sm:$0x1] %v175
    %s177 = sld [smem:[#allocation4 + $0x17]]
    %s178 = scalar_lea.vmem [#allocation8], %s177
    %v179 = vld [vmem:[%s178] sm:$0x1]
    %180 = vst [vmem:[#allocation2 + $0x17] sm:$0x1] %v179
    %s181 = sld [smem:[#allocation4 + $0x18]]
    %s182 = scalar_lea.vmem [#allocation8], %s181
    %v183 = vld [vmem:[%s182] sm:$0x1]
    %184 = vst [vmem:[#allocation2 + $0x18] sm:$0x1] %v183
    %s185 = sld [smem:[#allocation4 + $0x19]]
    %s186 = scalar_lea.vmem [#allocation8], %s185
    %v187 = vld [vmem:[%s186] sm:$0x1]
    %188 = vst [vmem:[#allocation2 + $0x19] sm:$0x1] %v187
    %s189 = sld [smem:[#allocation4 + $0x1a]]
    %s190 = scalar_lea.vmem [#allocation8], %s189
    %v191 = vld [vmem:[%s190] sm:$0x1]
    %192 = vst [vmem:[#allocation2 + $0x1a] sm:$0x1] %v191
    %s193 = sld [smem:[#allocation4 + $0x1b]]
    %s194 = scalar_lea.vmem [#allocation8], %s193
    %v195 = vld [vmem:[%s194] sm:$0x1]
    %196 = vst [vmem:[#allocation2 + $0x1b] sm:$0x1] %v195
    %s197 = sld [smem:[#allocation4 + $0x1c]]
    %s198 = scalar_lea.vmem [#allocation8], %s197
    %v199 = vld [vmem:[%s198] sm:$0x1]
    %200 = vst [vmem:[#allocation2 + $0x1c] sm:$0x1] %v199
    %s201 = sld [smem:[#allocation4 + $0x1d]]
    %s202 = scalar_lea.vmem [#allocation8], %s201
    %v203 = vld [vmem:[%s202] sm:$0x1]
    %204 = vst [vmem:[#allocation2 + $0x1d] sm:$0x1] %v203
    %s205 = sld [smem:[#allocation4 + $0x1e]]
    %s206 = scalar_lea.vmem [#allocation8], %s205
    %v207 = vld [vmem:[%s206] sm:$0x1]
    %208 = vst [vmem:[#allocation2 + $0x1e] sm:$0x1] %v207
    %s209 = sld [smem:[#allocation4 + $0x1f]]
    %s210 = scalar_lea.vmem [#allocation8], %s209
    %v211 = vld [vmem:[%s210] sm:$0x1]
    %212 = vst [vmem:[#allocation2 + $0x1f] sm:$0x1] %v211
    %s213 = sld [smem:[#allocation4 + $0x20]]
    %s214 = scalar_lea.vmem [#allocation8], %s213
    %v215 = vld [vmem:[%s214] sm:$0x1]
    %216 = vst [vmem:[#allocation2 + $0x20] sm:$0x1] %v215
    %s217 = sld [smem:[#allocation4 + $0x21]]
    %s218 = scalar_lea.vmem [#allocation8], %s217
    %v219 = vld [vmem:[%s218] sm:$0x1]
    %220 = vst [vmem:[#allocation2 + $0x21] sm:$0x1] %v219
    %s221 = sld [smem:[#allocation4 + $0x22]]
    %s222 = scalar_lea.vmem [#allocation8], %s221
    %v223 = vld [vmem:[%s222] sm:$0x1]
    %224 = vst [vmem:[#allocation2 + $0x22] sm:$0x1] %v223
    %s225 = sld [smem:[#allocation4 + $0x23]]
    %s226 = scalar_lea.vmem [#allocation8], %s225
    %v227 = vld [vmem:[%s226] sm:$0x1]
    %228 = vst [vmem:[#allocation2 + $0x23] sm:$0x1] %v227
    %s229 = sld [smem:[#allocation4 + $0x24]]
    %s230 = scalar_lea.vmem [#allocation8], %s229
    %v231 = vld [vmem:[%s230] sm:$0x1]
    %232 = vst [vmem:[#allocation2 + $0x24] sm:$0x1] %v231
    %s233 = sld [smem:[#allocation4 + $0x25]]
    %s234 = scalar_lea.vmem [#allocation8], %s233
    %v235 = vld [vmem:[%s234] sm:$0x1]
    %236 = vst [vmem:[#allocation2 + $0x25] sm:$0x1] %v235
    %s237 = sld [smem:[#allocation4 + $0x26]]
    %s238 = scalar_lea.vmem [#allocation8], %s237
    %v239 = vld [vmem:[%s238] sm:$0x1]
    %240 = vst [vmem:[#allocation2 + $0x26] sm:$0x1] %v239
    %s241 = sld [smem:[#allocation4 + $0x27]]
    %s242 = scalar_lea.vmem [#allocation8], %s241
    %v243 = vld [vmem:[%s242] sm:$0x1]
    %244 = vst [vmem:[#allocation2 + $0x27] sm:$0x1] %v243
    %s245 = sld [smem:[#allocation4 + $0x28]]
    %s246 = scalar_lea.vmem [#allocation8], %s245
    %v247 = vld [vmem:[%s246] sm:$0x1]
    %248 = vst [vmem:[#allocation2 + $0x28] sm:$0x1] %v247
    %s249 = sld [smem:[#allocation4 + $0x29]]
    %s250 = scalar_lea.vmem [#allocation8], %s249
    %v251 = vld [vmem:[%s250] sm:$0x1]
    %252 = vst [vmem:[#allocation2 + $0x29] sm:$0x1] %v251
    %s253 = sld [smem:[#allocation4 + $0x2a]]
    %s254 = scalar_lea.vmem [#allocation8], %s253
    %v255 = vld [vmem:[%s254] sm:$0x1]
    %256 = vst [vmem:[#allocation2 + $0x2a] sm:$0x1] %v255
    %s257 = sld [smem:[#allocation4 + $0x2b]]
    %s258 = scalar_lea.vmem [#allocation8], %s257
    %v259 = vld [vmem:[%s258] sm:$0x1]
    %260 = vst [vmem:[#allocation2 + $0x2b] sm:$0x1] %v259
    %s261 = sld [smem:[#allocation4 + $0x2c]]
    %s262 = scalar_lea.vmem [#allocation8], %s261
    %v263 = vld [vmem:[%s262] sm:$0x1]
    %264 = vst [vmem:[#allocation2 + $0x2c] sm:$0x1] %v263
    %s265 = sld [smem:[#allocation4 + $0x2d]]
    %s266 = scalar_lea.vmem [#allocation8], %s265
    %v267 = vld [vmem:[%s266] sm:$0x1]
    %268 = vst [vmem:[#allocation2 + $0x2d] sm:$0x1] %v267
    %s269 = sld [smem:[#allocation4 + $0x2e]]
    %s270 = scalar_lea.vmem [#allocation8], %s269
    %v271 = vld [vmem:[%s270] sm:$0x1]
    %272 = vst [vmem:[#allocation2 + $0x2e] sm:$0x1] %v271
    %s273 = sld [smem:[#allocation4 + $0x2f]]
    %s274 = scalar_lea.vmem [#allocation8], %s273
    %v275 = vld [vmem:[%s274] sm:$0x1]
    %276 = vst [vmem:[#allocation2 + $0x2f] sm:$0x1] %v275
    %s277 = sld [smem:[#allocation4 + $0x30]]
    %s278 = scalar_lea.vmem [#allocation8], %s277
    %v279 = vld [vmem:[%s278] sm:$0x1]
    %280 = vst [vmem:[#allocation2 + $0x30] sm:$0x1] %v279
    %s281 = sld [smem:[#allocation4 + $0x31]]
    %s282 = scalar_lea.vmem [#allocation8], %s281
    %v283 = vld [vmem:[%s282] sm:$0x1]
    %284 = vst [vmem:[#allocation2 + $0x31] sm:$0x1] %v283
    %s285 = sld [smem:[#allocation4 + $0x32]]
    %s286 = scalar_lea.vmem [#allocation8], %s285
    %v287 = vld [vmem:[%s286] sm:$0x1]
    %288 = vst [vmem:[#allocation2 + $0x32] sm:$0x1] %v287
    %s289 = sld [smem:[#allocation4 + $0x33]]
    %s290 = scalar_lea.vmem [#allocation8], %s289
    %v291 = vld [vmem:[%s290] sm:$0x1]
    %292 = vst [vmem:[#allocation2 + $0x33] sm:$0x1] %v291
    %s293 = sld [smem:[#allocation4 + $0x34]]
    %s294 = scalar_lea.vmem [#allocation8], %s293
    %v295 = vld [vmem:[%s294] sm:$0x1]
    %296 = vst [vmem:[#allocation2 + $0x34] sm:$0x1] %v295
    %s297 = sld [smem:[#allocation4 + $0x35]]
    %s298 = scalar_lea.vmem [#allocation8], %s297
    %v299 = vld [vmem:[%s298] sm:$0x1]
    %300 = vst [vmem:[#allocation2 + $0x35] sm:$0x1] %v299
    %s301 = sld [smem:[#allocation4 + $0x36]]
    %s302 = scalar_lea.vmem [#allocation8], %s301
    %v303 = vld [vmem:[%s302] sm:$0x1]
    %304 = vst [vmem:[#allocation2 + $0x36] sm:$0x1] %v303
    %s305 = sld [smem:[#allocation4 + $0x37]]
    %s306 = scalar_lea.vmem [#allocation8], %s305
    %v307 = vld [vmem:[%s306] sm:$0x1]
    %308 = vst [vmem:[#allocation2 + $0x37] sm:$0x1] %v307
    %s309 = sld [smem:[#allocation4 + $0x38]]
    %s310 = scalar_lea.vmem [#allocation8], %s309
    %v311 = vld [vmem:[%s310] sm:$0x1]
    %312 = vst [vmem:[#allocation2 + $0x38] sm:$0x1] %v311
    %s313 = sld [smem:[#allocation4 + $0x39]]
    %s314 = scalar_lea.vmem [#allocation8], %s313
    %v315 = vld [vmem:[%s314] sm:$0x1]
    %316 = vst [vmem:[#allocation2 + $0x39] sm:$0x1] %v315
    %s317 = sld [smem:[#allocation4 + $0x3a]]
    %s318 = scalar_lea.vmem [#allocation8], %s317
    %v319 = vld [vmem:[%s318] sm:$0x1]
    %320 = vst [vmem:[#allocation2 + $0x3a] sm:$0x1] %v319
    %s321 = sld [smem:[#allocation4 + $0x3b]]
    %s322 = scalar_lea.vmem [#allocation8], %s321
    %v323 = vld [vmem:[%s322] sm:$0x1]
    %324 = vst [vmem:[#allocation2 + $0x3b] sm:$0x1] %v323
    %s325 = sld [smem:[#allocation4 + $0x3c]]
    %s326 = scalar_lea.vmem [#allocation8], %s325
    %v327 = vld [vmem:[%s326] sm:$0x1]
    %328 = vst [vmem:[#allocation2 + $0x3c] sm:$0x1] %v327
    %s329 = sld [smem:[#allocation4 + $0x3d]]
    %s330 = scalar_lea.vmem [#allocation8], %s329
    %v331 = vld [vmem:[%s330] sm:$0x1]
    %332 = vst [vmem:[#allocation2 + $0x3d] sm:$0x1] %v331
    %s333 = sld [smem:[#allocation4 + $0x3e]]
    %s334 = scalar_lea.vmem [#allocation8], %s333
    %v335 = vld [vmem:[%s334] sm:$0x1]
    %336 = vst [vmem:[#allocation2 + $0x3e] sm:$0x1] %v335
    %s337 = sld [smem:[#allocation4 + $0x3f]]
    %s338 = scalar_lea.vmem [#allocation8], %s337
    %v339 = vld [vmem:[%s338] sm:$0x1]
    %340 = vst [vmem:[#allocation2 + $0x3f] sm:$0x1] %v339
    %v341 = vld [vmem:[#allocation5] sm:$0xff]
    %v342 = vld [vmem:[#allocation10] sm:$0xff]
    %v343 = vld [vmem:[#allocation10 + $0x8] sm:$0xff]
    %v344 = vld [vmem:[#allocation10 + $0x10] sm:$0xff]
    %v345 = vld [vmem:[#allocation10 + $0x18] sm:$0xff]
    %v346 = vld [vmem:[#allocation10 + $0x20] sm:$0xff]
    %v347 = vld [vmem:[#allocation10 + $0x28] sm:$0xff]
    %v348 = vld [vmem:[#allocation10 + $0x30] sm:$0xff]
    %v349 = vld [vmem:[#allocation10 + $0x38] sm:$0xff]
    %v350 = vld [vmem:[#allocation10 + $0x40] sm:$0xff]
    %v351 = vld [vmem:[#allocation10 + $0x48] sm:$0xff]
    %v352 = vld [vmem:[#allocation10 + $0x50] sm:$0xff]
    %v353 = vld [vmem:[#allocation10 + $0x58] sm:$0xff]
    %v354 = vld [vmem:[#allocation10 + $0x60] sm:$0xff]
    %v355 = vld [vmem:[#allocation10 + $0x68] sm:$0xff]
    %v356 = vld [vmem:[#allocation10 + $0x70] sm:$0xff]
    %v357 = vld [vmem:[#allocation10 + $0x78] sm:$0xff]
    %v358 = vld [vmem:[%s4] sm:$0x1]
    %v359 = vld [vmem:[#allocation2] sm:$0xff]
    %360 = vmatprep.subr.mxu0 0.0
    %361 = vmatpush1.msra.mxu0 %v342
    %362 = vmatprep.subr.mxu0 0.0
    %363 = vmatpush1.msra.mxu0 %v343
    %364 = vmatprep.subr.mxu0 0.0
    %365 = vmatpush1.msra.mxu0 %v344
    %366 = vmatprep.subr.mxu0 0.0
    %367 = vmatpush1.msra.mxu0 %v345
    %368 = vmatprep.subr.mxu0 0.0
    %369 = vmatpush1.msra.mxu0 %v346
    %370 = vmatprep.subr.mxu0 0.0
    %371 = vmatpush1.msra.mxu0 %v347
    %372 = vmatprep.subr.mxu0 0.0
    %373 = vmatpush1.msra.mxu0 %v348
    %374 = vmatprep.subr.mxu0 0.0
    %375 = vmatpush1.msra.mxu0 %v349
    %376 = vmatprep.subr.mxu0 0.0
    %377 = vmatpush1.msra.mxu0 %v350
    %378 = vmatprep.subr.mxu0 0.0
    %379 = vmatpush1.msra.mxu0 %v351
    %380 = vmatprep.subr.mxu0 0.0
    %381 = vmatpush1.msra.mxu0 %v352
    %382 = vmatprep.subr.mxu0 0.0
    %383 = vmatpush1.msra.mxu0 %v353
    %384 = vmatprep.subr.mxu0 0.0
    %385 = vmatpush1.msra.mxu0 %v354
    %386 = vmatprep.subr.mxu0 0.0
    %387 = vmatpush1.msra.mxu0 %v355
    %388 = vmatprep.subr.mxu0 0.0
    %389 = vmatpush1.msra.mxu0 %v356
    %390 = vmatprep.subr.mxu0 0.0
    %391 = vmatpush1.msra.mxu0 %v357
    %392 = vmatprep.subr.mxu0 0.0
    %393 = vmatpush1.msra.mxu0 0.0
    %394 = vmatprep.subr.mxu0 0.0
    %395 = vmatpush1.msra.mxu0 0.0
    %396 = vmatprep.subr.mxu0 0.0
    %397 = vmatpush1.msra.mxu0 0.0
    %398 = vmatprep.subr.mxu0 0.0
    %399 = vmatpush1.msra.mxu0 0.0
    %400 = vmatprep.subr.mxu0 0.0
    %401 = vmatpush1.msra.mxu0 0.0
    %402 = vmatprep.subr.mxu0 0.0
    %403 = vmatpush1.msra.mxu0 0.0
    %404 = vmatprep.subr.mxu0 0.0
    %405 = vmatpush1.msra.mxu0 0.0
    %406 = vmatprep.subr.mxu0 0.0
    %407 = vmatpush1.msra.mxu0 0.0
    %408 = vmatprep.subr.mxu0 0.0
    %409 = vmatpush1.msra.mxu0 0.0
    %410 = vmatprep.subr.mxu0 0.0
    %411 = vmatpush1.msra.mxu0 0.0
    %412 = vmatprep.subr.mxu0 0.0
    %413 = vmatpush1.msra.mxu0 0.0
    %414 = vmatprep.subr.mxu0 0.0
    %415 = vmatpush1.msra.mxu0 0.0
    %416 = vmatprep.subr.mxu0 0.0
    %417 = vmatpush1.msra.mxu0 0.0
    %418 = vmatprep.subr.mxu0 0.0
    %419 = vmatpush1.msra.mxu0 0.0
    %420 = vmatprep.subr.mxu0 0.0
    %421 = vmatpush1.msra.mxu0 0.0
    %422 = vmatprep.subr.mxu0 0.0
    %423 = vmatpush1.msra.mxu0 0.0
    %424 = vmatprep.mubr.f32.mxu0 0.0
    %425 = vmatmul.mubr.f32.gmra.mrb[0].mxu0 %v341
    %v426 = vpop.f32.mrb[0].mxu0
    %v427 = vadd.f32 0.0, %v426
    %v428 = vpop.f32.mrb[0].mxu0
    %429 = vdwg.mxu0
    %v430 = vadd.f32 %v359, %v427
    %v432 = vlaneseq
    %v433 = vshrl.u32 %v432, 7
    %v434 = vsub.s32 0, %v433
    %v435 = vrot.slane %v358, %v434
    %v437 = vadd.f32 %v430, %v435
    %v438 = vtanh.pop %v437
    %439 = vst [vmem:[#allocation2] sm:$0xff] %v438
    %v440 = vld [vmem:[#allocation2 + $0x8] sm:$0xff]
    %441 = vmatprep.subr.mxu0 0.0
    %442 = vmatpush1.msra.mxu0 %v342
    %443 = vmatprep.subr.mxu0 0.0
    %444 = vmatpush1.msra.mxu0 %v343
    %445 = vmatprep.subr.mxu0 0.0
    %446 = vmatpush1.msra.mxu0 %v344
    %447 = vmatprep.subr.mxu0 0.0
    %448 = vmatpush1.msra.mxu0 %v345
    %449 = vmatprep.subr.mxu0 0.0
    %450 = vmatpush1.msra.mxu0 %v346
    %451 = vmatprep.subr.mxu0 0.0
    %452 = vmatpush1.msra.mxu0 %v347
    %453 = vmatprep.subr.mxu0 0.0
    %454 = vmatpush1.msra.mxu0 %v348
    %455 = vmatprep.subr.mxu0 0.0
    %456 = vmatpush1.msra.mxu0 %v349
    %457 = vmatprep.subr.mxu0 0.0
    %458 = vmatpush1.msra.mxu0 %v350
    %459 = vmatprep.subr.mxu0 0.0
    %460 = vmatpush1.msra.mxu0 %v351
    %461 = vmatprep.subr.mxu0 0.0
    %462 = vmatpush1.msra.mxu0 %v352
    %463 = vmatprep.subr.mxu0 0.0
    %464 = vmatpush1.msra.mxu0 %v353
    %465 = vmatprep.subr.mxu0 0.0
    %466 = vmatpush1.msra.mxu0 %v354
    %467 = vmatprep.subr.mxu0 0.0
    %468 = vmatpush1.msra.mxu0 %v355
    %469 = vmatprep.subr.mxu0 0.0
    %470 = vmatpush1.msra.mxu0 %v356
    %471 = vmatprep.subr.mxu0 0.0
    %472 = vmatpush1.msra.mxu0 %v357
    %473 = vmatprep.subr.mxu0 0.0
    %474 = vmatpush1.msra.mxu0 0.0
    %475 = vmatprep.subr.mxu0 0.0
    %476 = vmatpush1.msra.mxu0 0.0
    %477 = vmatprep.subr.mxu0 0.0
    %478 = vmatpush1.msra.mxu0 0.0
    %479 = vmatprep.subr.mxu0 0.0
    %480 = vmatpush1.msra.mxu0 0.0
    %481 = vmatprep.subr.mxu0 0.0
    %482 = vmatpush1.msra.mxu0 0.0
    %483 = vmatprep.subr.mxu0 0.0
    %484 = vmatpush1.msra.mxu0 0.0
    %485 = vmatprep.subr.mxu0 0.0
    %486 = vmatpush1.msra.mxu0 0.0
    %487 = vmatprep.subr.mxu0 0.0
    %488 = vmatpush1.msra.mxu0 0.0
    %489 = vmatprep.subr.mxu0 0.0
    %490 = vmatpush1.msra.mxu0 0.0
    %491 = vmatprep.subr.mxu0 0.0
    %492 = vmatpush1.msra.mxu0 0.0
    %493 = vmatprep.subr.mxu0 0.0
    %494 = vmatpush1.msra.mxu0 0.0
    %495 = vmatprep.subr.mxu0 0.0
    %496 = vmatpush1.msra.mxu0 0.0
    %497 = vmatprep.subr.mxu0 0.0
    %498 = vmatpush1.msra.mxu0 0.0
    %499 = vmatprep.subr.mxu0 0.0
    %500 = vmatpush1.msra.mxu0 0.0
    %501 = vmatprep.subr.mxu0 0.0
    %502 = vmatpush1.msra.mxu0 0.0
    %503 = vmatprep.subr.mxu0 0.0
    %504 = vmatpush1.msra.mxu0 0.0
    %505 = vmatprep.mubr.f32.mxu0 0.0
    %506 = vmatmul.mubr.f32.gmra.mrb[0].mxu0 %v438
    %v507 = vpop.f32.mrb[0].mxu0
    %v508 = vadd.f32 0.0, %v507
    %v509 = vpop.f32.mrb[0].mxu0
    %510 = vdwg.mxu0
    %v511 = vadd.f32 %v440, %v508
    %v512 = vadd.f32 %v511, %v435
    %v513 = vtanh.pop %v512
    %514 = vst [vmem:[#allocation2 + $0x8] sm:$0xff] %v513
    %v515 = vld [vmem:[#allocation2 + $0x10] sm:$0xff]
    %516 = vmatprep.subr.mxu0 0.0
    %517 = vmatpush1.msra.mxu0 %v342
    %518 = vmatprep.subr.mxu0 0.0
    %519 = vmatpush1.msra.mxu0 %v343
    %520 = vmatprep.subr.mxu0 0.0
    %521 = vmatpush1.msra.mxu0 %v344
    %522 = vmatprep.subr.mxu0 0.0
    %523 = vmatpush1.msra.mxu0 %v345
    %524 = vmatprep.subr.mxu0 0.0
    %525 = vmatpush1.msra.mxu0 %v346
    %526 = vmatprep.subr.mxu0 0.0
    %527 = vmatpush1.msra.mxu0 %v347
    %528 = vmatprep.subr.mxu0 0.0
    %529 = vmatpush1.msra.mxu0 %v348
    %530 = vmatprep.subr.mxu0 0.0
    %531 = vmatpush1.msra.mxu0 %v349
    %532 = vmatprep.subr.mxu0 0.0
    %533 = vmatpush1.msra.mxu0 %v350
    %534 = vmatprep.subr.mxu0 0.0
    %535 = vmatpush1.msra.mxu0 %v351
    %536 = vmatprep.subr.mxu0 0.0
    %537 = vmatpush1.msra.mxu0 %v352
    %538 = vmatprep.subr.mxu0 0.0
    %539 = vmatpush1.msra.mxu0 %v353
    %540 = vmatprep.subr.mxu0 0.0
    %541 = vmatpush1.msra.mxu0 %v354
    %542 = vmatprep.subr.mxu0 0.0
    %543 = vmatpush1.msra.mxu0 %v355
    %544 = vmatprep.subr.mxu0 0.0
    %545 = vmatpush1.msra.mxu0 %v356
    %546 = vmatprep.subr.mxu0 0.0
    %547 = vmatpush1.msra.mxu0 %v357
    %548 = vmatprep.subr.mxu0 0.0
    %549 = vmatpush1.msra.mxu0 0.0
    %550 = vmatprep.subr.mxu0 0.0
    %551 = vmatpush1.msra.mxu0 0.0
    %552 = vmatprep.subr.mxu0 0.0
    %553 = vmatpush1.msra.mxu0 0.0
    %554 = vmatprep.subr.mxu0 0.0
    %555 = vmatpush1.msra.mxu0 0.0
    %556 = vmatprep.subr.mxu0 0.0
    %557 = vmatpush1.msra.mxu0 0.0
    %558 = vmatprep.subr.mxu0 0.0
    %559 = vmatpush1.msra.mxu0 0.0
    %560 = vmatprep.subr.mxu0 0.0
    %561 = vmatpush1.msra.mxu0 0.0
    %562 = vmatprep.subr.mxu0 0.0
    %563 = vmatpush1.msra.mxu0 0.0
    %564 = vmatprep.subr.mxu0 0.0
    %565 = vmatpush1.msra.mxu0 0.0
    %566 = vmatprep.subr.mxu0 0.0
    %567 = vmatpush1.msra.mxu0 0.0
    %568 = vmatprep.subr.mxu0 0.0
    %569 = vmatpush1.msra.mxu0 0.0
    %570 = vmatprep.subr.mxu0 0.0
    %571 = vmatpush1.msra.mxu0 0.0
    %572 = vmatprep.subr.mxu0 0.0
    %573 = vmatpush1.msra.mxu0 0.0
    %574 = vmatprep.subr.mxu0 0.0
    %575 = vmatpush1.msra.mxu0 0.0
    %576 = vmatprep.subr.mxu0 0.0
    %577 = vmatpush1.msra.mxu0 0.0
    %578 = vmatprep.subr.mxu0 0.0
    %579 = vmatpush1.msra.mxu0 0.0
    %580 = vmatprep.mubr.f32.mxu0 0.0
    %581 = vmatmul.mubr.f32.gmra.mrb[0].mxu0 %v513
    %v582 = vpop.f32.mrb[0].mxu0
    %v583 = vadd.f32 0.0, %v582
    %v584 = vpop.f32.mrb[0].mxu0
    %585 = vdwg.mxu0
    %v586 = vadd.f32 %v515, %v583
    %v587 = vadd.f32 %v586, %v435
    %v588 = vtanh.pop %v587
    %589 = vst [vmem:[#allocation2 + $0x10] sm:$0xff] %v588
    %v590 = vld [vmem:[#allocation2 + $0x18] sm:$0xff]
    %591 = vmatprep.subr.mxu0 0.0
    %592 = vmatpush1.msra.mxu0 %v342
    %593 = vmatprep.subr.mxu0 0.0
    %594 = vmatpush1.msra.mxu0 %v343
    %595 = vmatprep.subr.mxu0 0.0
    %596 = vmatpush1.msra.mxu0 %v344
    %597 = vmatprep.subr.mxu0 0.0
    %598 = vmatpush1.msra.mxu0 %v345
    %599 = vmatprep.subr.mxu0 0.0
    %600 = vmatpush1.msra.mxu0 %v346
    %601 = vmatprep.subr.mxu0 0.0
    %602 = vmatpush1.msra.mxu0 %v347
    %603 = vmatprep.subr.mxu0 0.0
    %604 = vmatpush1.msra.mxu0 %v348
    %605 = vmatprep.subr.mxu0 0.0
    %606 = vmatpush1.msra.mxu0 %v349
    %607 = vmatprep.subr.mxu0 0.0
    %608 = vmatpush1.msra.mxu0 %v350
    %609 = vmatprep.subr.mxu0 0.0
    %610 = vmatpush1.msra.mxu0 %v351
    %611 = vmatprep.subr.mxu0 0.0
    %612 = vmatpush1.msra.mxu0 %v352
    %613 = vmatprep.subr.mxu0 0.0
    %614 = vmatpush1.msra.mxu0 %v353
    %615 = vmatprep.subr.mxu0 0.0
    %616 = vmatpush1.msra.mxu0 %v354
    %617 = vmatprep.subr.mxu0 0.0
    %618 = vmatpush1.msra.mxu0 %v355
    %619 = vmatprep.subr.mxu0 0.0
    %620 = vmatpush1.msra.mxu0 %v356
    %621 = vmatprep.subr.mxu0 0.0
    %622 = vmatpush1.msra.mxu0 %v357
    %623 = vmatprep.subr.mxu0 0.0
    %624 = vmatpush1.msra.mxu0 0.0
    %625 = vmatprep.subr.mxu0 0.0
    %626 = vmatpush1.msra.mxu0 0.0
    %627 = vmatprep.subr.mxu0 0.0
    %628 = vmatpush1.msra.mxu0 0.0
    %629 = vmatprep.subr.mxu0 0.0
    %630 = vmatpush1.msra.mxu0 0.0
    %631 = vmatprep.subr.mxu0 0.0
    %632 = vmatpush1.msra.mxu0 0.0
    %633 = vmatprep.subr.mxu0 0.0
    %634 = vmatpush1.msra.mxu0 0.0
    %635 = vmatprep.subr.mxu0 0.0
    %636 = vmatpush1.msra.mxu0 0.0
    %637 = vmatprep.subr.mxu0 0.0
    %638 = vmatpush1.msra.mxu0 0.0
    %639 = vmatprep.subr.mxu0 0.0
    %640 = vmatpush1.msra.mxu0 0.0
    %641 = vmatprep.subr.mxu0 0.0
    %642 = vmatpush1.msra.mxu0 0.0
    %643 = vmatprep.subr.mxu0 0.0
    %644 = vmatpush1.msra.mxu0 0.0
    %645 = vmatprep.subr.mxu0 0.0
    %646 = vmatpush1.msra.mxu0 0.0
    %647 = vmatprep.subr.mxu0 0.0
    %648 = vmatpush1.msra.mxu0 0.0
    %649 = vmatprep.subr.mxu0 0.0
    %650 = vmatpush1.msra.mxu0 0.0
    %651 = vmatprep.subr.mxu0 0.0
    %652 = vmatpush1.msra.mxu0 0.0
    %653 = vmatprep.subr.mxu0 0.0
    %654 = vmatpush1.msra.mxu0 0.0
    %655 = vmatprep.mubr.f32.mxu0 0.0
    %656 = vmatmul.mubr.f32.gmra.mrb[0].mxu0 %v588
    %v657 = vpop.f32.mrb[0].mxu0
    %v658 = vadd.f32 0.0, %v657
    %v659 = vpop.f32.mrb[0].mxu0
    %660 = vdwg.mxu0
    %v661 = vadd.f32 %v590, %v658
    %v662 = vadd.f32 %v661, %v435
    %v663 = vtanh.pop %v662
    %664 = vst [vmem:[#allocation2 + $0x18] sm:$0xff] %v663
    %v665 = vld [vmem:[#allocation2 + $0x20] sm:$0xff]
    %666 = vmatprep.subr.mxu0 0.0
    %667 = vmatpush1.msra.mxu0 %v342
    %668 = vmatprep.subr.mxu0 0.0
    %669 = vmatpush1.msra.mxu0 %v343
    %670 = vmatprep.subr.mxu0 0.0
    %671 = vmatpush1.msra.mxu0 %v344
    %672 = vmatprep.subr.mxu0 0.0
    %673 = vmatpush1.msra.mxu0 %v345
    %674 = vmatprep.subr.mxu0 0.0
    %675 = vmatpush1.msra.mxu0 %v346
    %676 = vmatprep.subr.mxu0 0.0
    %677 = vmatpush1.msra.mxu0 %v347
    %678 = vmatprep.subr.mxu0 0.0
    %679 = vmatpush1.msra.mxu0 %v348
    %680 = vmatprep.subr.mxu0 0.0
    %681 = vmatpush1.msra.mxu0 %v349
    %682 = vmatprep.subr.mxu0 0.0
    %683 = vmatpush1.msra.mxu0 %v350
    %684 = vmatprep.subr.mxu0 0.0
    %685 = vmatpush1.msra.mxu0 %v351
    %686 = vmatprep.subr.mxu0 0.0
    %687 = vmatpush1.msra.mxu0 %v352
    %688 = vmatprep.subr.mxu0 0.0
    %689 = vmatpush1.msra.mxu0 %v353
    %690 = vmatprep.subr.mxu0 0.0
    %691 = vmatpush1.msra.mxu0 %v354
    %692 = vmatprep.subr.mxu0 0.0
    %693 = vmatpush1.msra.mxu0 %v355
    %694 = vmatprep.subr.mxu0 0.0
    %695 = vmatpush1.msra.mxu0 %v356
    %696 = vmatprep.subr.mxu0 0.0
    %697 = vmatpush1.msra.mxu0 %v357
    %698 = vmatprep.subr.mxu0 0.0
    %699 = vmatpush1.msra.mxu0 0.0
    %700 = vmatprep.subr.mxu0 0.0
    %701 = vmatpush1.msra.mxu0 0.0
    %702 = vmatprep.subr.mxu0 0.0
    %703 = vmatpush1.msra.mxu0 0.0
    %704 = vmatprep.subr.mxu0 0.0
    %705 = vmatpush1.msra.mxu0 0.0
    %706 = vmatprep.subr.mxu0 0.0
    %707 = vmatpush1.msra.mxu0 0.0
    %708 = vmatprep.subr.mxu0 0.0
    %709 = vmatpush1.msra.mxu0 0.0
    %710 = vmatprep.subr.mxu0 0.0
    %711 = vmatpush1.msra.mxu0 0.0
    %712 = vmatprep.subr.mxu0 0.0
    %713 = vmatpush1.msra.mxu0 0.0
    %714 = vmatprep.subr.mxu0 0.0
    %715 = vmatpush1.msra.mxu0 0.0
    %716 = vmatprep.subr.mxu0 0.0
    %717 = vmatpush1.msra.mxu0 0.0
    %718 = vmatprep.subr.mxu0 0.0
    %719 = vmatpush1.msra.mxu0 0.0
    %720 = vmatprep.subr.mxu0 0.0
    %721 = vmatpush1.msra.mxu0 0.0
    %722 = vmatprep.subr.mxu0 0.0
    %723 = vmatpush1.msra.mxu0 0.0
    %724 = vmatprep.subr.mxu0 0.0
    %725 = vmatpush1.msra.mxu0 0.0
    %726 = vmatprep.subr.mxu0 0.0
    %727 = vmatpush1.msra.mxu0 0.0
    %728 = vmatprep.subr.mxu0 0.0
    %729 = vmatpush1.msra.mxu0 0.0
    %730 = vmatprep.mubr.f32.mxu0 0.0
    %731 = vmatmul.mubr.f32.gmra.mrb[0].mxu0 %v663
    %v732 = vpop.f32.mrb[0].mxu0
    %v733 = vadd.f32 0.0, %v732
    %v734 = vpop.f32.mrb[0].mxu0
    %735 = vdwg.mxu0
    %v736 = vadd.f32 %v665, %v733
    %v737 = vadd.f32 %v736, %v435
    %v738 = vtanh.pop %v737
    %739 = vst [vmem:[#allocation2 + $0x20] sm:$0xff] %v738
    %v740 = vld [vmem:[#allocation2 + $0x28] sm:$0xff]
    %741 = vmatprep.subr.mxu0 0.0
    %742 = vmatpush1.msra.mxu0 %v342
    %743 = vmatprep.subr.mxu0 0.0
    %744 = vmatpush1.msra.mxu0 %v343
    %745 = vmatprep.subr.mxu0 0.0
    %746 = vmatpush1.msra.mxu0 %v344
    %747 = vmatprep.subr.mxu0 0.0
    %748 = vmatpush1.msra.mxu0 %v345
    %749 = vmatprep.subr.mxu0 0.0
    %750 = vmatpush1.msra.mxu0 %v346
    %751 = vmatprep.subr.mxu0 0.0
    %752 = vmatpush1.msra.mxu0 %v347
    %753 = vmatprep.subr.mxu0 0.0
    %754 = vmatpush1.msra.mxu0 %v348
    %755 = vmatprep.subr.mxu0 0.0
    %756 = vmatpush1.msra.mxu0 %v349
    %757 = vmatprep.subr.mxu0 0.0
    %758 = vmatpush1.msra.mxu0 %v350
    %759 = vmatprep.subr.mxu0 0.0
    %760 = vmatpush1.msra.mxu0 %v351
    %761 = vmatprep.subr.mxu0 0.0
    %762 = vmatpush1.msra.mxu0 %v352
    %763 = vmatprep.subr.mxu0 0.0
    %764 = vmatpush1.msra.mxu0 %v353
    %765 = vmatprep.subr.mxu0 0.0
    %766 = vmatpush1.msra.mxu0 %v354
    %767 = vmatprep.subr.mxu0 0.0
    %768 = vmatpush1.msra.mxu0 %v355
    %769 = vmatprep.subr.mxu0 0.0
    %770 = vmatpush1.msra.mxu0 %v356
    %771 = vmatprep.subr.mxu0 0.0
    %772 = vmatpush1.msra.mxu0 %v357
    %773 = vmatprep.subr.mxu0 0.0
    %774 = vmatpush1.msra.mxu0 0.0
    %775 = vmatprep.subr.mxu0 0.0
    %776 = vmatpush1.msra.mxu0 0.0
    %777 = vmatprep.subr.mxu0 0.0
    %778 = vmatpush1.msra.mxu0 0.0
    %779 = vmatprep.subr.mxu0 0.0
    %780 = vmatpush1.msra.mxu0 0.0
    %781 = vmatprep.subr.mxu0 0.0
    %782 = vmatpush1.msra.mxu0 0.0
    %783 = vmatprep.subr.mxu0 0.0
    %784 = vmatpush1.msra.mxu0 0.0
    %785 = vmatprep.subr.mxu0 0.0
    %786 = vmatpush1.msra.mxu0 0.0
    %787 = vmatprep.subr.mxu0 0.0
    %788 = vmatpush1.msra.mxu0 0.0
    %789 = vmatprep.subr.mxu0 0.0
    %790 = vmatpush1.msra.mxu0 0.0
    %791 = vmatprep.subr.mxu0 0.0
    %792 = vmatpush1.msra.mxu0 0.0
    %793 = vmatprep.subr.mxu0 0.0
    %794 = vmatpush1.msra.mxu0 0.0
    %795 = vmatprep.subr.mxu0 0.0
    %796 = vmatpush1.msra.mxu0 0.0
    %797 = vmatprep.subr.mxu0 0.0
    %798 = vmatpush1.msra.mxu0 0.0
    %799 = vmatprep.subr.mxu0 0.0
    %800 = vmatpush1.msra.mxu0 0.0
    %801 = vmatprep.subr.mxu0 0.0
    %802 = vmatpush1.msra.mxu0 0.0
    %803 = vmatprep.subr.mxu0 0.0
    %804 = vmatpush1.msra.mxu0 0.0
    %805 = vmatprep.mubr.f32.mxu0 0.0
    %806 = vmatmul.mubr.f32.gmra.mrb[0].mxu0 %v738
    %v807 = vpop.f32.mrb[0].mxu0
    %v808 = vadd.f32 0.0, %v807
    %v809 = vpop.f32.mrb[0].mxu0
    %810 = vdwg.mxu0
    %v811 = vadd.f32 %v740, %v808
    %v812 = vadd.f32 %v811, %v435
    %v813 = vtanh.pop %v812
    %814 = vst [vmem:[#allocation2 + $0x28] sm:$0xff] %v813
    %v815 = vld [vmem:[#allocation2 + $0x30] sm:$0xff]
    %816 = vmatprep.subr.mxu0 0.0
    %817 = vmatpush1.msra.mxu0 %v342
    %818 = vmatprep.subr.mxu0 0.0
    %819 = vmatpush1.msra.mxu0 %v343
    %820 = vmatprep.subr.mxu0 0.0
    %821 = vmatpush1.msra.mxu0 %v344
    %822 = vmatprep.subr.mxu0 0.0
    %823 = vmatpush1.msra.mxu0 %v345
    %824 = vmatprep.subr.mxu0 0.0
    %825 = vmatpush1.msra.mxu0 %v346
    %826 = vmatprep.subr.mxu0 0.0
    %827 = vmatpush1.msra.mxu0 %v347
    %828 = vmatprep.subr.mxu0 0.0
    %829 = vmatpush1.msra.mxu0 %v348
    %830 = vmatprep.subr.mxu0 0.0
    %831 = vmatpush1.msra.mxu0 %v349
    %832 = vmatprep.subr.mxu0 0.0
    %833 = vmatpush1.msra.mxu0 %v350
    %834 = vmatprep.subr.mxu0 0.0
    %835 = vmatpush1.msra.mxu0 %v351
    %836 = vmatprep.subr.mxu0 0.0
    %837 = vmatpush1.msra.mxu0 %v352
    %838 = vmatprep.subr.mxu0 0.0
    %839 = vmatpush1.msra.mxu0 %v353
    %840 = vmatprep.subr.mxu0 0.0
    %841 = vmatpush1.msra.mxu0 %v354
    %842 = vmatprep.subr.mxu0 0.0
    %843 = vmatpush1.msra.mxu0 %v355
    %844 = vmatprep.subr.mxu0 0.0
    %845 = vmatpush1.msra.mxu0 %v356
    %846 = vmatprep.subr.mxu0 0.0
    %847 = vmatpush1.msra.mxu0 %v357
    %848 = vmatprep.subr.mxu0 0.0
    %849 = vmatpush1.msra.mxu0 0.0
    %850 = vmatprep.subr.mxu0 0.0
    %851 = vmatpush1.msra.mxu0 0.0
    %852 = vmatprep.subr.mxu0 0.0
    %853 = vmatpush1.msra.mxu0 0.0
    %854 = vmatprep.subr.mxu0 0.0
    %855 = vmatpush1.msra.mxu0 0.0
    %856 = vmatprep.subr.mxu0 0.0
    %857 = vmatpush1.msra.mxu0 0.0
    %858 = vmatprep.subr.mxu0 0.0
    %859 = vmatpush1.msra.mxu0 0.0
    %860 = vmatprep.subr.mxu0 0.0
    %861 = vmatpush1.msra.mxu0 0.0
    %862 = vmatprep.subr.mxu0 0.0
    %863 = vmatpush1.msra.mxu0 0.0
    %864 = vmatprep.subr.mxu0 0.0
    %865 = vmatpush1.msra.mxu0 0.0
    %866 = vmatprep.subr.mxu0 0.0
    %867 = vmatpush1.msra.mxu0 0.0
    %868 = vmatprep.subr.mxu0 0.0
    %869 = vmatpush1.msra.mxu0 0.0
    %870 = vmatprep.subr.mxu0 0.0
    %871 = vmatpush1.msra.mxu0 0.0
    %872 = vmatprep.subr.mxu0 0.0
    %873 = vmatpush1.msra.mxu0 0.0
    %874 = vmatprep.subr.mxu0 0.0
    %875 = vmatpush1.msra.mxu0 0.0
    %876 = vmatprep.subr.mxu0 0.0
    %877 = vmatpush1.msra.mxu0 0.0
    %878 = vmatprep.subr.mxu0 0.0
    %879 = vmatpush1.msra.mxu0 0.0
    %880 = vmatprep.mubr.f32.mxu0 0.0
    %881 = vmatmul.mubr.f32.gmra.mrb[0].mxu0 %v813
    %v882 = vpop.f32.mrb[0].mxu0
    %v883 = vadd.f32 0.0, %v882
    %v884 = vpop.f32.mrb[0].mxu0
    %885 = vdwg.mxu0
    %v886 = vadd.f32 %v815, %v883
    %v887 = vadd.f32 %v886, %v435
    %v888 = vtanh.pop %v887
    %889 = vst [vmem:[#allocation2 + $0x30] sm:$0xff] %v888
    %v890 = vld [vmem:[#allocation2 + $0x38] sm:$0xff]
    %891 = vmatprep.subr.mxu0 0.0
    %892 = vmatpush1.msra.mxu0 %v342
    %893 = vmatprep.subr.mxu0 0.0
    %894 = vmatpush1.msra.mxu0 %v343
    %895 = vmatprep.subr.mxu0 0.0
    %896 = vmatpush1.msra.mxu0 %v344
    %897 = vmatprep.subr.mxu0 0.0
    %898 = vmatpush1.msra.mxu0 %v345
    %899 = vmatprep.subr.mxu0 0.0
    %900 = vmatpush1.msra.mxu0 %v346
    %901 = vmatprep.subr.mxu0 0.0
    %902 = vmatpush1.msra.mxu0 %v347
    %903 = vmatprep.subr.mxu0 0.0
    %904 = vmatpush1.msra.mxu0 %v348
    %905 = vmatprep.subr.mxu0 0.0
    %906 = vmatpush1.msra.mxu0 %v349
    %907 = vmatprep.subr.mxu0 0.0
    %908 = vmatpush1.msra.mxu0 %v350
    %909 = vmatprep.subr.mxu0 0.0
    %910 = vmatpush1.msra.mxu0 %v351
    %911 = vmatprep.subr.mxu0 0.0
    %912 = vmatpush1.msra.mxu0 %v352
    %913 = vmatprep.subr.mxu0 0.0
    %914 = vmatpush1.msra.mxu0 %v353
    %915 = vmatprep.subr.mxu0 0.0
    %916 = vmatpush1.msra.mxu0 %v354
    %917 = vmatprep.subr.mxu0 0.0
    %918 = vmatpush1.msra.mxu0 %v355
    %919 = vmatprep.subr.mxu0 0.0
    %920 = vmatpush1.msra.mxu0 %v356
    %921 = vmatprep.subr.mxu0 0.0
    %922 = vmatpush1.msra.mxu0 %v357
    %923 = vmatprep.subr.mxu0 0.0
    %924 = vmatpush1.msra.mxu0 0.0
    %925 = vmatprep.subr.mxu0 0.0
    %926 = vmatpush1.msra.mxu0 0.0
    %927 = vmatprep.subr.mxu0 0.0
    %928 = vmatpush1.msra.mxu0 0.0
    %929 = vmatprep.subr.mxu0 0.0
    %930 = vmatpush1.msra.mxu0 0.0
    %931 = vmatprep.subr.mxu0 0.0
    %932 = vmatpush1.msra.mxu0 0.0
    %933 = vmatprep.subr.mxu0 0.0
    %934 = vmatpush1.msra.mxu0 0.0
    %935 = vmatprep.subr.mxu0 0.0
    %936 = vmatpush1.msra.mxu0 0.0
    %937 = vmatprep.subr.mxu0 0.0
    %938 = vmatpush1.msra.mxu0 0.0
    %939 = vmatprep.subr.mxu0 0.0
    %940 = vmatpush1.msra.mxu0 0.0
    %941 = vmatprep.subr.mxu0 0.0
    %942 = vmatpush1.msra.mxu0 0.0
    %943 = vmatprep.subr.mxu0 0.0
    %944 = vmatpush1.msra.mxu0 0.0
    %945 = vmatprep.subr.mxu0 0.0
    %946 = vmatpush1.msra.mxu0 0.0
    %947 = vmatprep.subr.mxu0 0.0
    %948 = vmatpush1.msra.mxu0 0.0
    %949 = vmatprep.subr.mxu0 0.0
    %950 = vmatpush1.msra.mxu0 0.0
    %951 = vmatprep.subr.mxu0 0.0
    %952 = vmatpush1.msra.mxu0 0.0
    %953 = vmatprep.subr.mxu0 0.0
    %954 = vmatpush1.msra.mxu0 0.0
    %955 = vmatprep.mubr.f32.mxu0 0.0
    %956 = vmatmul.mubr.f32.gmra.mrb[0].mxu0 %v888
    %v957 = vpop.f32.mrb[0].mxu0
    %v958 = vadd.f32 0.0, %v957
    %v959 = vpop.f32.mrb[0].mxu0
    %960 = vdwg.mxu0
    %v961 = vadd.f32 %v890, %v958
    %v962 = vadd.f32 %v961, %v435
    %v963 = vtanh.pop %v962
    %964 = vst [vmem:[#allocation2 + $0x38] sm:$0xff] %v963
    %965 = vst [vmem:[#allocation14] sm:$0xff] %v963
    %v966 = vld [vmem:[#allocation2] sm:$0xff]
    %v967 = vld [vmem:[#allocation2 + $0x8] sm:$0xff]
    %v968 = vld [vmem:[#allocation2 + $0x10] sm:$0xff]
    %v969 = vld [vmem:[#allocation2 + $0x18] sm:$0xff]
    %v970 = vld [vmem:[#allocation2 + $0x20] sm:$0xff]
    %v971 = vld [vmem:[#allocation2 + $0x28] sm:$0xff]
    %v972 = vld [vmem:[#allocation2 + $0x30] sm:$0xff]
    %v973 = vld [vmem:[#allocation2 + $0x38] sm:$0xff]
    %v974 = vld [vmem:[#allocation11] sm:$0xff]
    %v975 = vld [vmem:[#allocation11 + $0x8] sm:$0xff]
    %v976 = vld [vmem:[#allocation11 + $0x10] sm:$0xff]
    %v977 = vld [vmem:[#allocation11 + $0x18] sm:$0xff]
    %v978 = vld [vmem:[#allocation11 + $0x20] sm:$0xff]
    %v979 = vld [vmem:[#allocation11 + $0x28] sm:$0xff]
    %v980 = vld [vmem:[#allocation11 + $0x30] sm:$0xff]
    %v981 = vld [vmem:[#allocation11 + $0x38] sm:$0xff]
    %v982 = vld [vmem:[#allocation11 + $0x40] sm:$0xff]
    %v983 = vld [vmem:[#allocation11 + $0x48] sm:$0xff]
    %v984 = vld [vmem:[#allocation11 + $0x50] sm:$0xff]
    %v985 = vld [vmem:[#allocation11 + $0x58] sm:$0xff]
    %v986 = vld [vmem:[#allocation11 + $0x60] sm:$0xff]
    %v987 = vld [vmem:[#allocation11 + $0x68] sm:$0xff]
    %v988 = vld [vmem:[#allocation11 + $0x70] sm:$0xff]
    %v989 = vld [vmem:[#allocation11 + $0x78] sm:$0xff]
    %v990 = vld [vmem:[%s6] sm:$0x1]
    %v992 = vlaneseq
    %v993 = vshrl.u32 %v992, 7
    %v994 = vsub.s32 0, %v993
    %v995 = vrot.slane %v990, %v994
    %997 = vmatprep.subr.mxu0 0.0
    %998 = vmatpush1.msra.mxu0 %v974
    %999 = vmatprep.subr.mxu0 0.0
    %1000 = vmatpush1.msra.mxu0 %v975
    %1001 = vmatprep.subr.mxu0 0.0
    %1002 = vmatpush1.msra.mxu0 %v976
    %1003 = vmatprep.subr.mxu0 0.0
    %1004 = vmatpush1.msra.mxu0 %v977
    %1005 = vmatprep.subr.mxu0 0.0
    %1006 = vmatpush1.msra.mxu0 %v978
    %1007 = vmatprep.subr.mxu0 0.0
    %1008 = vmatpush1.msra.mxu0 %v979
    %1009 = vmatprep.subr.mxu0 0.0
    %1010 = vmatpush1.msra.mxu0 %v980
    %1011 = vmatprep.subr.mxu0 0.0
    %1012 = vmatpush1.msra.mxu0 %v981
    %1013 = vmatprep.subr.mxu0 0.0
    %1014 = vmatpush1.msra.mxu0 %v982
    %1015 = vmatprep.subr.mxu0 0.0
    %1016 = vmatpush1.msra.mxu0 %v983
    %1017 = vmatprep.subr.mxu0 0.0
    %1018 = vmatpush1.msra.mxu0 %v984
    %1019 = vmatprep.subr.mxu0 0.0
    %1020 = vmatpush1.msra.mxu0 %v985
    %1021 = vmatprep.subr.mxu0 0.0
    %1022 = vmatpush1.msra.mxu0 %v986
    %1023 = vmatprep.subr.mxu0 0.0
    %1024 = vmatpush1.msra.mxu0 %v987
    %1025 = vmatprep.subr.mxu0 0.0
    %1026 = vmatpush1.msra.mxu0 %v988
    %1027 = vmatprep.subr.mxu0 0.0
    %1028 = vmatpush1.msra.mxu0 %v989
    %1029 = vmatprep.subr.mxu0 0.0
    %1030 = vmatpush1.msra.mxu0 0.0
    %1031 = vmatprep.subr.mxu0 0.0
    %1032 = vmatpush1.msra.mxu0 0.0
    %1033 = vmatprep.subr.mxu0 0.0
    %1034 = vmatpush1.msra.mxu0 0.0
    %1035 = vmatprep.subr.mxu0 0.0
    %1036 = vmatpush1.msra.mxu0 0.0
    %1037 = vmatprep.subr.mxu0 0.0
    %1038 = vmatpush1.msra.mxu0 0.0
    %1039 = vmatprep.subr.mxu0 0.0
    %1040 = vmatpush1.msra.mxu0 0.0
    %1041 = vmatprep.subr.mxu0 0.0
    %1042 = vmatpush1.msra.mxu0 0.0
    %1043 = vmatprep.subr.mxu0 0.0
    %1044 = vmatpush1.msra.mxu0 0.0
    %1045 = vmatprep.subr.mxu0 0.0
    %1046 = vmatpush1.msra.mxu0 0.0
    %1047 = vmatprep.subr.mxu0 0.0
    %1048 = vmatpush1.msra.mxu0 0.0
    %1049 = vmatprep.subr.mxu0 0.0
    %1050 = vmatpush1.msra.mxu0 0.0
    %1051 = vmatprep.subr.mxu0 0.0
    %1052 = vmatpush1.msra.mxu0 0.0
    %1053 = vmatprep.subr.mxu0 0.0
    %1054 = vmatpush1.msra.mxu0 0.0
    %1055 = vmatprep.subr.mxu0 0.0
    %1056 = vmatpush1.msra.mxu0 0.0
    %1057 = vmatprep.subr.mxu0 0.0
    %1058 = vmatpush1.msra.mxu0 0.0
    %1059 = vmatprep.subr.mxu0 0.0
    %1060 = vmatpush1.msra.mxu0 0.0
    %1061 = vmatprep.mubr.f32.mxu0 0.0
    %1062 = vmatmul.mubr.f32.gmra.mrb[0].mxu0 %v966
    %v1063 = vpop.f32.mrb[0].mxu0
    %v1064 = vadd.f32 %v995, %v1063
    %v1065 = vpop.f32.mrb[0].mxu0
    %1066 = vmatprep.mubr.f32.mxu0 0.0
    %1067 = vmatmul.mubr.f32.gmra.mrb[0].mxu0 %v967
    %v1068 = vpop.f32.mrb[0].mxu0
    %v1069 = vadd.f32 %v995, %v1068
    %v1070 = vpop.f32.mrb[0].mxu0
    %1071 = vmatprep.mubr.f32.mxu0 0.0
    %1072 = vmatmul.mubr.f32.gmra.mrb[0].mxu0 %v968
    %v1073 = vpop.f32.mrb[0].mxu0
    %v1074 = vadd.f32 %v995, %v1073
    %v1075 = vpop.f32.mrb[0].mxu0
    %1076 = vmatprep.mubr.f32.mxu0 0.0
    %1077 = vmatmul.mubr.f32.gmra.mrb[0].mxu0 %v969
    %v1078 = vpop.f32.mrb[0].mxu0
    %v1079 = vadd.f32 %v995, %v1078
    %v1080 = vpop.f32.mrb[0].mxu0
    %1081 = vmatprep.mubr.f32.mxu0 0.0
    %1082 = vmatmul.mubr.f32.gmra.mrb[0].mxu0 %v970
    %v1083 = vpop.f32.mrb[0].mxu0
    %v1084 = vadd.f32 %v995, %v1083
    %v1085 = vpop.f32.mrb[0].mxu0
    %1086 = vmatprep.mubr.f32.mxu0 0.0
    %1087 = vmatmul.mubr.f32.gmra.mrb[0].mxu0 %v971
    %v1088 = vpop.f32.mrb[0].mxu0
    %v1089 = vadd.f32 %v995, %v1088
    %v1090 = vpop.f32.mrb[0].mxu0
    %1091 = vmatprep.mubr.f32.mxu0 0.0
    %1092 = vmatmul.mubr.f32.gmra.mrb[0].mxu0 %v972
    %v1093 = vpop.f32.mrb[0].mxu0
    %v1094 = vadd.f32 %v995, %v1093
    %v1095 = vpop.f32.mrb[0].mxu0
    %1096 = vmatprep.mubr.f32.mxu0 0.0
    %1097 = vmatmul.mubr.f32.gmra.mrb[0].mxu0 %v973
    %v1098 = vpop.f32.mrb[0].mxu0
    %v1099 = vadd.f32 %v995, %v1098
    %v1100 = vpop.f32.mrb[0].mxu0
    %1101 = vdwg.mxu0
    %1102 = vst [vmem:[#allocation13] sm:$0xff] %v1064
    %1103 = vst [vmem:[#allocation13 + $0x8] sm:$0xff] %v1069
    %1104 = vst [vmem:[#allocation13 + $0x10] sm:$0xff] %v1074
    %1105 = vst [vmem:[#allocation13 + $0x18] sm:$0xff] %v1079
    %1106 = vst [vmem:[#allocation13 + $0x20] sm:$0xff] %v1084
    %1107 = vst [vmem:[#allocation13 + $0x28] sm:$0xff] %v1089
    %1108 = vst [vmem:[#allocation13 + $0x30] sm:$0xff] %v1094
    %1109 = vst [vmem:[#allocation13 + $0x38] sm:$0xff] %v1099
    // Predicated region
    $region42: #{tpu_custom_call.1} parent=1 // pred_check
      _
    $region43: #{tpu_custom_call.1} parent=1 // pred_check_branch
      %1111 = sbr.rel (0) target = $region45
    $region44: #{tpu_custom_call.1} parent=1 // pred_region
      %s1113 = ssub.s32 1024, 1024
      %1114 = vsyncadd [#allocation7], %s1113
      %s1115 = sshll.u32 [#allocation13], 4
      %s1116 = int_to_ptr.vmem [resolvable:$true] %s1115
      %1121 = dma.vmem_to_hbm [thread:$0]  %s1116, 1024, %s7, [#allocation7], 128, 128, 8
    $region45: #{tpu_custom_call.1} parent=1 // pred_fallthru
      _
    // Predicated region
    $region46: #{tpu_custom_call.1} parent=1 // pred_check
      _
    $region47: #{tpu_custom_call.1} parent=1 // pred_check_branch
      %1123 = sbr.rel (0) target = $region49
    $region48: #{tpu_custom_call.1} parent=1 // pred_region
      %s1125 = ssub.s32 128, 128
      %1126 = vsyncadd [#allocation15], %s1125
      %s1128 = sshll.u32 [#allocation14], 4
      %s1129 = int_to_ptr.vmem [resolvable:$true] %s1128
      %1131 = dma.vmem_to_hbm [thread:$0]  %s1129, 128, %s8, [#allocation15]
    $region49: #{tpu_custom_call.1} parent=1 // pred_fallthru
      _
    // Predicated region
    $region50: #{tpu_custom_call.1} parent=1 // pred_check
      _
    $region51: #{tpu_custom_call.1} parent=1 // pred_check_branch
      %1133 = sbr.rel (0) target = $region53
    $region52: #{tpu_custom_call.1} parent=1 // pred_region
      %1134 = dma.done [#allocation7], 1024
    $region53: #{tpu_custom_call.1} parent=1 // pred_fallthru
      _
    // Predicated region
    $region54: #{tpu_custom_call.1} parent=1 // pred_check
      _
    $region55: #{tpu_custom_call.1} parent=1 // pred_check_branch
      %1136 = sbr.rel (0) target = $region57
    $region56: #{tpu_custom_call.1} parent=1 // pred_region
      %1137 = dma.done [#allocation15], 128
    $region57: #{tpu_custom_call.1} parent=1 // pred_fallthru
      _
    %1138 = vsyncpa [#allocation6], 1
    %1139 = vsyncpa [#allocation9], 1
    %1140 = vsyncpa [#allocation12], 1
    %1141 = vsyncpa [#allocation7], 1
    %1142 = vsyncpa [#allocation15], 1

</llo_original>
